<compile_context>
chip_gen: v7x
topology: tpu7x:2x2x1
jax: 0.10.0
libtpu: 0.0.40
codegen_flags: <defaults>
</compile_context>

<pallas_src>
import functools

import jax
import jax.numpy as jnp
from jax.experimental import pallas as pl
from jax.experimental.pallas import tpu as pltpu


def _dymixprop_kernel(x_ref, blkr_ref, blkc_ref,
                      w1_ref, b1_ref, w2_ref, b2_ref,
                      wpk_ref, bsum_ref,
                      o_ref, hs_ref, *, gdep, alpha, c_in, block_b):
    f32 = jnp.float32
    C = c_in

    # Loop-invariant operands (loaded once per grid step).
    w1 = w1_ref[...].astype(f32)                  # (C, C)  w[o, c]
    w2 = w2_ref[...].astype(f32)
    b1 = b1_ref[...].astype(f32)                  # (C, 1)
    b2 = b2_ref[...].astype(f32)
    wpk = wpk_ref[...].astype(f32)                # (c_out, 2*(gdep+1)*C), (hop, branch, ch) packed
    bsum = bsum_ref[...].astype(f32)              # (c_out, 1) = bm1 + bm2
    # Block-diagonal mask generated in-kernel from two tiny block-id vectors
    # (replaces the old (LV,LV) f32 HBM mask input).
    mask = blkc_ref[...] == blkr_ref[...]         # (LV,1) == (1,LV) -> (LV,LV) bool
    alpha_f = jnp.float32(alpha)
    beta = jnp.float32(1.0 - alpha)
    neg_big = jnp.float32(-1e30)

    for bb in range(block_b):                     # static, small: amortizes per-grid-step overhead
        x = x_ref[bb].astype(f32)                 # (C, LV), lanes ordered (l, v)

        # lin1 / lin2 (1x1 convs) + tanh, directly in the lane-dense (C, LV) layout.
        x1 = jnp.tanh(jnp.dot(w1, x, preferred_element_type=f32) + b1)
        x2 = jnp.tanh(jnp.dot(w2, x, preferred_element_type=f32) + b2)

        # Dynamic adjacency: block-diagonal of the (LV, LV) Gram, contracting the channel dim.
        g = jax.lax.dot_general(x1, x2, (((0,), (0,)), ((), ())),
                                preferred_element_type=f32)   # g[i,j] = sum_c x1[c,i]*x2[c,j]
        g = jnp.where(mask, g, neg_big)
        gt = g.T                                  # hoisted ONCE: both softmaxes become row-wise
                                                  # and both hop matmuls use untransposed RHS.

        # adj0 = row-softmax(g); adj1 = row-softmax(g^T); fold (1-alpha) into the (LV,1) scale.
        e0 = jnp.exp(g - jnp.max(g, axis=-1, keepdims=True))
        a0 = e0 * (beta / jnp.sum(e0, axis=-1, keepdims=True))
        e1 = jnp.exp(gt - jnp.max(gt, axis=-1, keepdims=True))
        a1 = e1 * (beta / jnp.sum(e1, axis=-1, keepdims=True))
        # TODO(synk): pl.reciprocal(..., approx=True) would move the divide to the idle EUP slot,
        #             but its approximation error breaks the 2e-4 parity check; keep exact divide.

        ax = alpha_f * x                          # hoisted out of the hop loop

        # Mix-hop propagation. Hops stream into the (2*(gdep+1)*C, LV) VMEM slab so the two
        # output 1x1 convs collapse into ONE K=2*(gdep+1)*C matmul after the loop (instead of
        # 2*gdep tiny K=C matmuls on the serial critical path).
        hs_ref[pl.ds(0, C), :] = x                # hop 0, branch 1
        hs_ref[pl.ds(C, C), :] = x                # hop 0, branch 2
        h1 = x
        h2 = x
        for k in range(1, gdep + 1):
            # TODO(synk): a0/a1 are loop-invariant; pltpu.matmul_push_rhs staging would avoid
            #             re-pushing the (LV,LV) RHS for every M=C-row hop.
            h1 = ax + jnp.dot(h1, a0, preferred_element_type=f32)
            h2 = ax + jnp.dot(h2, a1, preferred_element_type=f32)
            hs_ref[pl.ds(2 * k * C, C), :] = h1
            hs_ref[pl.ds(2 * k * C + C, C), :] = h2

        o_ref[bb] = (jnp.dot(wpk, hs_ref[...], preferred_element_type=f32)
                     + bsum).astype(o_ref.dtype)


def _pick_block_b(B, LV):
    """Batch elements per grid step: amortize per-step overhead while keeping >= 4 grid steps
    (2 per v7x TensorCore) when B allows; only unroll multiple elements when the per-element
    (LV,LV) temporaries are small."""
    if LV > 256:
        return 1
    target = 4 if B >= 4 else B
    for bt in range(min(B, 8), 0, -1):
        if B % bt == 0 and B // bt >= target:
            return bt
    return 1


def dy_mix_propagation(x_nchw, w1, b1, w2, b2, wm1, bm1, wm2, bm2, *, gdep, alpha):
    """x_nchw: (B, C, V, L); w1,w2: (C, C); b1,b2: (C,);
    wm1,wm2: (c_out, (gdep+1)*C); bm1,bm2: (c_out,)."""
    B, C, V, L = x_nchw.shape
    c_out, kc = wm1.shape
    assert kc == (gdep + 1) * C
    LV = L * V
    # Cap re-derived for v7x (64 MiB VMEM): ~6 live (LV,LV) f32 temps must fit.
    # TODO(synk): for larger V*L, tile over (B, L) with per-l (V,V) adjacency blocks.
    assert LV <= 1024, "block-diagonal fast path requires L*V <= 1024"

    Bt = _pick_block_b(B, LV)
    grid_b = B // Bt

    # --- layout plumbing (plain JAX): single x layout, lanes ordered (l, v) ---
    x_cv = jnp.transpose(x_nchw, (0, 1, 3, 2)).reshape(B, C, LV)        # (B, C, L*V)
    blk = jnp.arange(LV, dtype=jnp.int32) // V                          # lane -> timestep block id
    blk_row = blk.reshape(1, LV)
    blk_col = blk.reshape(LV, 1)

    b1_k = b1.reshape(C, 1)
    b2_k = b2.reshape(C, 1)
    # Pack the two output 1x1 convs: columns ordered (hop, branch, channel) to match the
    # in-kernel hop slab, so the whole output projection is a single matmul.
    kpk = 2 * (gdep + 1) * C
    wpk = jnp.stack([wm1.reshape(c_out, gdep + 1, C),
                     wm2.reshape(c_out, gdep + 1, C)], axis=2).reshape(c_out, kpk)
    bsum = (bm1 + bm2).reshape(c_out, 1)

    # Explicit scoped-VMEM budget: per-element (LV,LV) temps + hop slab + double-buffered tiles.
    vmem_est = (Bt * 6 * LV * LV * 4 + kpk * LV * 4
                + 4 * Bt * (C + c_out) * LV * 4 + (2 << 20))
    vmem_limit = int(min(max(vmem_est, 32 << 20), 64 << 20))

    kernel = functools.partial(_dymixprop_kernel, gdep=gdep, alpha=alpha,
                               c_in=C, block_b=Bt)
    const = lambda b: (0, 0)

    out_k = pl.pallas_call(
        kernel,
        out_shape=jax.ShapeDtypeStruct((B, c_out, LV), x_nchw.dtype),
        grid_spec=pltpu.PrefetchScalarGridSpec(
            num_scalar_prefetch=0,
            grid=(grid_b,),
            in_specs=[
                pl.BlockSpec((Bt, C, LV), lambda b: (b, 0, 0)),
                pl.BlockSpec((1, LV), const),
                pl.BlockSpec((LV, 1), const),
                pl.BlockSpec((C, C), const),
                pl.BlockSpec((C, 1), const),
                pl.BlockSpec((C, C), const),
                pl.BlockSpec((C, 1), const),
                pl.BlockSpec((c_out, kpk), const),
                pl.BlockSpec((c_out, 1), const),
            ],
            out_specs=pl.BlockSpec((Bt, c_out, LV), lambda b: (b, 0, 0)),
            scratch_shapes=[pltpu.VMEM((kpk, LV), jnp.float32)],
        ),
        compiler_params=pltpu.CompilerParams(
            dimension_semantics=("parallel",),
            vmem_limit_bytes=vmem_limit),
    )(x_cv, blk_row, blk_col, w1, b1_k, w2, b2_k, wpk, bsum)

    # back to PyTorch NCHW: (B, c_out, V, L)
    return jnp.transpose(out_k.reshape(B, c_out, L, V), (0, 1, 3, 2))


def dy_mix_propagation_ref(x, w1, b1, w2, b2, wm1, bm1, wm2, bm2, *, gdep, alpha):
    """Pure-JAX reference matching the PyTorch DyMixPropagation forward exactly."""
    def conv1x1(t, w, b):
        return jnp.einsum('oc,ncvl->novl', w, t) + b.reshape(1, -1, 1, 1)

    x1 = jnp.tanh(conv1x1(x, w1, b1))
    x2 = jnp.tanh(conv1x1(x, w2, b2))
    adj = jnp.einsum('ncil,ncjl->nijl', x1, x2)
    adj0 = jax.nn.softmax(adj, axis=2)
    adj1 = jax.nn.softmax(jnp.swapaxes(adj, 1, 2), axis=2)

    def nconv(h, a):
        return jnp.einsum('ncvl,nvwl->ncwl', h, a)

    def mixhop(a):
        h = x
        outs = [h]
        for _ in range(gdep):
            h = alpha * x + (1.0 - alpha) * nconv(h, a)
            outs.append(h)
        return jnp.concatenate(outs, axis=1)

    ho1 = conv1x1(mixhop(adj0), wm1, bm1)
    ho2 = conv1x1(mixhop(adj1), wm2, bm2)
    return ho1 + ho2


if __name__ == "__main__":
    # small shapes consistent with the module: batch=2, c_in=4, num_nodes=16, seq=8
    B, C, V, L = 2, 4, 16, 8
    gdep, alpha, c_out = 3, 0.05, 8

    key = jax.random.PRNGKey(0)
    kx, k1, k2, k3, k4, k5, k6, k7, k8 = jax.random.split(key, 9)

    x = jax.random.normal(kx, (B, C, V, L), dtype=jnp.float32)
    # lin1/lin2: Conv2d(c_in, c_in, 1x1); mlp1/mlp2: Conv2d((gdep+1)*c_in, c_out, 1x1)
    w1 = 0.3 * jax.random.normal(k1, (C, C), dtype=jnp.float32)
    b1 = 0.1 * jax.random.normal(k2, (C,), dtype=jnp.float32)
    w2 = 0.3 * jax.random.normal(k3, (C, C), dtype=jnp.float32)
    b2 = 0.1 * jax.random.normal(k4, (C,), dtype=jnp.float32)
    wm1 = 0.1 * jax.random.normal(k5, (c_out, (gdep + 1) * C), dtype=jnp.float32)
    bm1 = 0.1 * jax.random.normal(k6, (c_out,), dtype=jnp.float32)
    wm2 = 0.1 * jax.random.normal(k7, (c_out, (gdep + 1) * C), dtype=jnp.float32)
    bm2 = 0.1 * jax.random.normal(k8, (c_out,), dtype=jnp.float32)

    out = dy_mix_propagation(x, w1, b1, w2, b2, wm1, bm1, wm2, bm2,
                             gdep=gdep, alpha=alpha)
    out = jax.block_until_ready(out)

    ref = dy_mix_propagation_ref(x, w1, b1, w2, b2, wm1, bm1, wm2, bm2,
                                 gdep=gdep, alpha=alpha)
    assert out.shape == (B, c_out, V, L)
    err = float(jnp.max(jnp.abs(out - ref)))
    assert jnp.allclose(out, ref, atol=2e-4, rtol=2e-4), f"mismatch vs reference, max abs err={err}"

    print("KERNEL_OK")
</pallas_src>

<mosaic_0001>
module attributes {stable_mosaic.version = 11 : i64} {
  func.func @_dymixprop_kernel(%arg0: i32, %arg1: memref<1x4x128xf32, #tpu.memory_space<vmem>>, %arg2: memref<1x128xi32, #tpu.memory_space<vmem>>, %arg3: memref<128x1xi32, #tpu.memory_space<vmem>>, %arg4: memref<4x4xf32, #tpu.memory_space<vmem>>, %arg5: memref<4x1xf32, #tpu.memory_space<vmem>>, %arg6: memref<4x4xf32, #tpu.memory_space<vmem>>, %arg7: memref<4x1xf32, #tpu.memory_space<vmem>>, %arg8: memref<8x32xf32, #tpu.memory_space<vmem>>, %arg9: memref<8x1xf32, #tpu.memory_space<vmem>>, %arg10: memref<1x8x128xf32, #tpu.memory_space<vmem>>, %arg11: memref<32x128xf32, #tpu.memory_space<vmem>>) attributes {dimension_semantics = [#tpu.dimension_semantics<parallel>], iteration_bounds = array<i64: 2>, scalar_prefetch = 0 : i64, scratch_operands = 1 : i64, tpu.core_type = #tpu.core_type<tc>, window_params = [{transform_indices = @transform_0, window_bounds = array<i64: 1, 4, 128>}, {pipeline_mode = #tpu.pipeline_mode<synchronous>, transform_indices = @transform_1, window_bounds = array<i64: 1, 128>}, {pipeline_mode = #tpu.pipeline_mode<synchronous>, transform_indices = @transform_2, window_bounds = array<i64: 128, 1>}, {pipeline_mode = #tpu.pipeline_mode<synchronous>, transform_indices = @transform_3, window_bounds = array<i64: 4, 4>}, {pipeline_mode = #tpu.pipeline_mode<synchronous>, transform_indices = @transform_4, window_bounds = array<i64: 4, 1>}, {pipeline_mode = #tpu.pipeline_mode<synchronous>, transform_indices = @transform_5, window_bounds = array<i64: 4, 4>}, {pipeline_mode = #tpu.pipeline_mode<synchronous>, transform_indices = @transform_6, window_bounds = array<i64: 4, 1>}, {pipeline_mode = #tpu.pipeline_mode<synchronous>, transform_indices = @transform_7, window_bounds = array<i64: 8, 32>}, {pipeline_mode = #tpu.pipeline_mode<synchronous>, transform_indices = @transform_8, window_bounds = array<i64: 8, 1>}, {transform_indices = @transform_9, window_bounds = array<i64: 1, 8, 128>}]} {
    %c0 = arith.constant 0 : index
    %c0_0 = arith.constant 0 : index
    %0 = vector.load %arg4[%c0, %c0_0] : memref<4x4xf32, #tpu.memory_space<vmem>>, vector<4x4xf32>
    %c0_1 = arith.constant 0 : index
    %c0_2 = arith.constant 0 : index
    %1 = vector.load %arg6[%c0_1, %c0_2] : memref<4x4xf32, #tpu.memory_space<vmem>>, vector<4x4xf32>
    %c0_3 = arith.constant 0 : index
    %c0_4 = arith.constant 0 : index
    %2 = vector.load %arg5[%c0_3, %c0_4] : memref<4x1xf32, #tpu.memory_space<vmem>>, vector<4x1xf32>
    %c0_5 = arith.constant 0 : index
    %c0_6 = arith.constant 0 : index
    %3 = vector.load %arg7[%c0_5, %c0_6] : memref<4x1xf32, #tpu.memory_space<vmem>>, vector<4x1xf32>
    %c0_7 = arith.constant 0 : index
    %c0_8 = arith.constant 0 : index
    %4 = vector.load %arg8[%c0_7, %c0_8] : memref<8x32xf32, #tpu.memory_space<vmem>>, vector<8x32xf32>
    %c0_9 = arith.constant 0 : index
    %c0_10 = arith.constant 0 : index
    %5 = vector.load %arg9[%c0_9, %c0_10] : memref<8x1xf32, #tpu.memory_space<vmem>>, vector<8x1xf32>
    %c0_11 = arith.constant 0 : index
    %c0_12 = arith.constant 0 : index
    %6 = vector.load %arg3[%c0_11, %c0_12] : memref<128x1xi32, #tpu.memory_space<vmem>>, vector<128x1xi32>
    %c0_13 = arith.constant 0 : index
    %c0_14 = arith.constant 0 : index
    %7 = vector.load %arg2[%c0_13, %c0_14] : memref<1x128xi32, #tpu.memory_space<vmem>>, vector<1x128xi32>
    %8 = vector.broadcast %6 : vector<128x1xi32> to vector<128x128xi32>
    %9 = vector.broadcast %7 : vector<1x128xi32> to vector<128x128xi32>
    %10 = arith.cmpi eq, %8, %9 : vector<128x128xi32>
    %c0_15 = arith.constant 0 : index
    %c0_16 = arith.constant 0 : index
    %c0_17 = arith.constant 0 : index
    %11 = vector.load %arg1[%c0_15, %c0_16, %c0_17] : memref<1x4x128xf32, #tpu.memory_space<vmem>>, vector<1x4x128xf32>
    %12 = vector.shape_cast %11 : vector<1x4x128xf32> to vector<4x128xf32>
    %cst = arith.constant dense<0.000000e+00> : vector<4x128xf32>
    %13 = tpu.matmul %0, %12, %cst {dimension_numbers = #tpu.dot_dimension_numbers<[1], [0], [0], [1], [0, 0, 1, 1], [], []>} : vector<4x4xf32>, vector<4x128xf32>, vector<4x128xf32> -> vector<4x128xf32>
    %14 = vector.broadcast %2 : vector<4x1xf32> to vector<4x128xf32>
    %15 = arith.addf %13, %14 : vector<4x128xf32>
    %16 = math.tanh %15 : vector<4x128xf32>
    %cst_18 = arith.constant dense<0.000000e+00> : vector<4x128xf32>
    %17 = tpu.matmul %1, %12, %cst_18 {dimension_numbers = #tpu.dot_dimension_numbers<[1], [0], [0], [1], [0, 0, 1, 1], [], []>} : vector<4x4xf32>, vector<4x128xf32>, vector<4x128xf32> -> vector<4x128xf32>
    %18 = vector.broadcast %3 : vector<4x1xf32> to vector<4x128xf32>
    %19 = arith.addf %17, %18 : vector<4x128xf32>
    %20 = math.tanh %19 : vector<4x128xf32>
    %cst_19 = arith.constant dense<0.000000e+00> : vector<128x128xf32>
    %21 = tpu.matmul %16, %20, %cst_19 {dimension_numbers = #tpu.dot_dimension_numbers<[0], [0], [1], [1], [0, 1, 1, 1], [], []>} : vector<4x128xf32>, vector<4x128xf32>, vector<128x128xf32> -> vector<128x128xf32>
    %cst_20 = arith.constant -1.000000e+30 : f32
    %22 = vector.broadcast %cst_20 : f32 to vector<128x128xf32>
    %23 = arith.select %10, %21, %22 : vector<128x128xi1>, vector<128x128xf32>
    %24 = tpu.transpose %23, [1, 0] : vector<128x128xf32> -> vector<128x128xf32>
    %cst_21 = arith.constant dense<0xFF800000> : vector<128xf32>
    %25 = vector.multi_reduction <maximumf>, %23, %cst_21 [1] : vector<128x128xf32> to vector<128xf32>
    %26 = vector.shape_cast %25 : vector<128xf32> to vector<128x1xf32>
    %27 = vector.broadcast %26 : vector<128x1xf32> to vector<128x128xf32>
    %28 = arith.subf %23, %27 : vector<128x128xf32>
    %29 = math.exp %28 : vector<128x128xf32>
    %cst_22 = arith.constant dense<0.000000e+00> : vector<128xf32>
    %30 = vector.multi_reduction <add>, %29, %cst_22 [1] : vector<128x128xf32> to vector<128xf32>
    %31 = vector.shape_cast %30 : vector<128xf32> to vector<128x1xf32>
    %cst_23 = arith.constant 0.949999988 : f32
    %32 = vector.broadcast %cst_23 : f32 to vector<128x1xf32>
    %33 = arith.divf %32, %31 : vector<128x1xf32>
    %34 = vector.broadcast %33 : vector<128x1xf32> to vector<128x128xf32>
    %35 = arith.mulf %29, %34 : vector<128x128xf32>
    %cst_24 = arith.constant dense<0xFF800000> : vector<128xf32>
    %36 = vector.multi_reduction <maximumf>, %24, %cst_24 [1] : vector<128x128xf32> to vector<128xf32>
    %37 = vector.shape_cast %36 : vector<128xf32> to vector<128x1xf32>
    %38 = vector.broadcast %37 : vector<128x1xf32> to vector<128x128xf32>
    %39 = arith.subf %24, %38 : vector<128x128xf32>
    %40 = math.exp %39 : vector<128x128xf32>
    %cst_25 = arith.constant dense<0.000000e+00> : vector<128xf32>
    %41 = vector.multi_reduction <add>, %40, %cst_25 [1] : vector<128x128xf32> to vector<128xf32>
    %42 = vector.shape_cast %41 : vector<128xf32> to vector<128x1xf32>
    %cst_26 = arith.constant 0.949999988 : f32
    %43 = vector.broadcast %cst_26 : f32 to vector<128x1xf32>
    %44 = arith.divf %43, %42 : vector<128x1xf32>
    %45 = vector.broadcast %44 : vector<128x1xf32> to vector<128x128xf32>
    %46 = arith.mulf %40, %45 : vector<128x128xf32>
    %cst_27 = arith.constant 5.000000e-02 : f32
    %47 = vector.broadcast %cst_27 : f32 to vector<4x128xf32>
    %48 = arith.mulf %47, %12 : vector<4x128xf32>
    %c0_28 = arith.constant 0 : index
    %c0_29 = arith.constant 0 : index
    %49 = vector.load %arg11[%c0_28, %c0_29] : memref<32x128xf32, #tpu.memory_space<vmem>>, vector<4x128xf32>
    tpu.vector_store %arg11[%c0_28, %c0_29], %12 {strides = array<i32>} : memref<32x128xf32, #tpu.memory_space<vmem>>, vector<4x128xf32>,
    %c4 = arith.constant 4 : index
    %c0_30 = arith.constant 0 : index
    %50 = vector.load %arg11[%c4, %c0_30] : memref<32x128xf32, #tpu.memory_space<vmem>>, vector<4x128xf32>
    tpu.vector_store %arg11[%c4, %c0_30], %12 {strides = array<i32>} : memref<32x128xf32, #tpu.memory_space<vmem>>, vector<4x128xf32>,
    %cst_31 = arith.constant dense<0.000000e+00> : vector<4x128xf32>
    %51 = tpu.matmul %12, %35, %cst_31 {dimension_numbers = #tpu.dot_dimension_numbers<[1], [0], [0], [1], [0, 0, 1, 1], [], []>} : vector<4x128xf32>, vector<128x128xf32>, vector<4x128xf32> -> vector<4x128xf32>
    %52 = arith.addf %48, %51 : vector<4x128xf32>
    %cst_32 = arith.constant dense<0.000000e+00> : vector<4x128xf32>
    %53 = tpu.matmul %12, %46, %cst_32 {dimension_numbers = #tpu.dot_dimension_numbers<[1], [0], [0], [1], [0, 0, 1, 1], [], []>} : vector<4x128xf32>, vector<128x128xf32>, vector<4x128xf32> -> vector<4x128xf32>
    %54 = arith.addf %48, %53 : vector<4x128xf32>
    %c8 = arith.constant 8 : index
    %c0_33 = arith.constant 0 : index
    %55 = vector.load %arg11[%c8, %c0_33] : memref<32x128xf32, #tpu.memory_space<vmem>>, vector<4x128xf32>
    tpu.vector_store %arg11[%c8, %c0_33], %52 {strides = array<i32>} : memref<32x128xf32, #tpu.memory_space<vmem>>, vector<4x128xf32>,
    %c12 = arith.constant 12 : index
    %c0_34 = arith.constant 0 : index
    %56 = vector.load %arg11[%c12, %c0_34] : memref<32x128xf32, #tpu.memory_space<vmem>>, vector<4x128xf32>
    tpu.vector_store %arg11[%c12, %c0_34], %54 {strides = array<i32>} : memref<32x128xf32, #tpu.memory_space<vmem>>, vector<4x128xf32>,
    %cst_35 = arith.constant dense<0.000000e+00> : vector<4x128xf32>
    %57 = tpu.matmul %52, %35, %cst_35 {dimension_numbers = #tpu.dot_dimension_numbers<[1], [0], [0], [1], [0, 0, 1, 1], [], []>} : vector<4x128xf32>, vector<128x128xf32>, vector<4x128xf32> -> vector<4x128xf32>
    %58 = arith.addf %48, %57 : vector<4x128xf32>
    %cst_36 = arith.constant dense<0.000000e+00> : vector<4x128xf32>
    %59 = tpu.matmul %54, %46, %cst_36 {dimension_numbers = #tpu.dot_dimension_numbers<[1], [0], [0], [1], [0, 0, 1, 1], [], []>} : vector<4x128xf32>, vector<128x128xf32>, vector<4x128xf32> -> vector<4x128xf32>
    %60 = arith.addf %48, %59 : vector<4x128xf32>
    %c16 = arith.constant 16 : index
    %c0_37 = arith.constant 0 : index
    %61 = vector.load %arg11[%c16, %c0_37] : memref<32x128xf32, #tpu.memory_space<vmem>>, vector<4x128xf32>
    tpu.vector_store %arg11[%c16, %c0_37], %58 {strides = array<i32>} : memref<32x128xf32, #tpu.memory_space<vmem>>, vector<4x128xf32>,
    %c20 = arith.constant 20 : index
    %c0_38 = arith.constant 0 : index
    %62 = vector.load %arg11[%c20, %c0_38] : memref<32x128xf32, #tpu.memory_space<vmem>>, vector<4x128xf32>
    tpu.vector_store %arg11[%c20, %c0_38], %60 {strides = array<i32>} : memref<32x128xf32, #tpu.memory_space<vmem>>, vector<4x128xf32>,
    %cst_39 = arith.constant dense<0.000000e+00> : vector<4x128xf32>
    %63 = tpu.matmul %58, %35, %cst_39 {dimension_numbers = #tpu.dot_dimension_numbers<[1], [0], [0], [1], [0, 0, 1, 1], [], []>} : vector<4x128xf32>, vector<128x128xf32>, vector<4x128xf32> -> vector<4x128xf32>
    %64 = arith.addf %48, %63 : vector<4x128xf32>
    %cst_40 = arith.constant dense<0.000000e+00> : vector<4x128xf32>
    %65 = tpu.matmul %60, %46, %cst_40 {dimension_numbers = #tpu.dot_dimension_numbers<[1], [0], [0], [1], [0, 0, 1, 1], [], []>} : vector<4x128xf32>, vector<128x128xf32>, vector<4x128xf32> -> vector<4x128xf32>
    %66 = arith.addf %48, %65 : vector<4x128xf32>
    %c24 = arith.constant 24 : index
    %c0_41 = arith.constant 0 : index
    %67 = vector.load %arg11[%c24, %c0_41] : memref<32x128xf32, #tpu.memory_space<vmem>>, vector<4x128xf32>
    tpu.vector_store %arg11[%c24, %c0_41], %64 {strides = array<i32>} : memref<32x128xf32, #tpu.memory_space<vmem>>, vector<4x128xf32>,
    %c28 = arith.constant 28 : index
    %c0_42 = arith.constant 0 : index
    %68 = vector.load %arg11[%c28, %c0_42] : memref<32x128xf32, #tpu.memory_space<vmem>>, vector<4x128xf32>
    tpu.vector_store %arg11[%c28, %c0_42], %66 {strides = array<i32>} : memref<32x128xf32, #tpu.memory_space<vmem>>, vector<4x128xf32>,
    %c0_43 = arith.constant 0 : index
    %c0_44 = arith.constant 0 : index
    %69 = vector.load %arg11[%c0_43, %c0_44] : memref<32x128xf32, #tpu.memory_space<vmem>>, vector<32x128xf32>
    %cst_45 = arith.constant dense<0.000000e+00> : vector<8x128xf32>
    %70 = tpu.matmul %4, %69, %cst_45 {dimension_numbers = #tpu.dot_dimension_numbers<[1], [0], [0], [1], [0, 0, 1, 1], [], []>} : vector<8x32xf32>, vector<32x128xf32>, vector<8x128xf32> -> vector<8x128xf32>
    %71 = vector.broadcast %5 : vector<8x1xf32> to vector<8x128xf32>
    %72 = arith.addf %70, %71 : vector<8x128xf32>
    %c0_46 = arith.constant 0 : index
    %c0_47 = arith.constant 0 : index
    %c0_48 = arith.constant 0 : index
    %73 = vector.load %arg10[%c0_46, %c0_47, %c0_48] : memref<1x8x128xf32, #tpu.memory_space<vmem>>, vector<1x8x128xf32>
    %74 = vector.shape_cast %73 : vector<1x8x128xf32> to vector<8x128xf32>
    %75 = vector.shape_cast %72 : vector<8x128xf32> to vector<1x8x128xf32>
    tpu.vector_store %arg10[%c0_46, %c0_47, %c0_48], %75 {strides = array<i32>} : memref<1x8x128xf32, #tpu.memory_space<vmem>>, vector<1x8x128xf32>,
    return
  }
  func.func @transform_0(%arg0: i32) -> (i32, i32, i32) {
    %c0_i32 = arith.constant 0 : i32
    %c0_i32_0 = arith.constant 0 : i32
    %c0_i32_1 = arith.constant 0 : i32
    return %arg0, %c0_i32, %c0_i32_0 : i32, i32, i32
  }
  func.func @transform_1(%arg0: i32) -> (i32, i32) {
    %c0_i32 = arith.constant 0 : i32
    %c0_i32_0 = arith.constant 0 : i32
    %c0_i32_1 = arith.constant 0 : i32
    return %c0_i32, %c0_i32_0 : i32, i32
  }
  func.func @transform_2(%arg0: i32) -> (i32, i32) {
    %c0_i32 = arith.constant 0 : i32
    %c0_i32_0 = arith.constant 0 : i32
    %c0_i32_1 = arith.constant 0 : i32
    return %c0_i32, %c0_i32_0 : i32, i32
  }
  func.func @transform_3(%arg0: i32) -> (i32, i32) {
    %c0_i32 = arith.constant 0 : i32
    %c0_i32_0 = arith.constant 0 : i32
    %c0_i32_1 = arith.constant 0 : i32
    return %c0_i32, %c0_i32_0 : i32, i32
  }
  func.func @transform_4(%arg0: i32) -> (i32, i32) {
    %c0_i32 = arith.constant 0 : i32
    %c0_i32_0 = arith.constant 0 : i32
    %c0_i32_1 = arith.constant 0 : i32
    return %c0_i32, %c0_i32_0 : i32, i32
  }
  func.func @transform_5(%arg0: i32) -> (i32, i32) {
    %c0_i32 = arith.constant 0 : i32
    %c0_i32_0 = arith.constant 0 : i32
    %c0_i32_1 = arith.constant 0 : i32
    return %c0_i32, %c0_i32_0 : i32, i32
  }
  func.func @transform_6(%arg0: i32) -> (i32, i32) {
    %c0_i32 = arith.constant 0 : i32
    %c0_i32_0 = arith.constant 0 : i32
    %c0_i32_1 = arith.constant 0 : i32
    return %c0_i32, %c0_i32_0 : i32, i32
  }
  func.func @transform_7(%arg0: i32) -> (i32, i32) {
    %c0_i32 = arith.constant 0 : i32
    %c0_i32_0 = arith.constant 0 : i32
    %c0_i32_1 = arith.constant 0 : i32
    return %c0_i32, %c0_i32_0 : i32, i32
  }
  func.func @transform_8(%arg0: i32) -> (i32, i32) {
    %c0_i32 = arith.constant 0 : i32
    %c0_i32_0 = arith.constant 0 : i32
    %c0_i32_1 = arith.constant 0 : i32
    return %c0_i32, %c0_i32_0 : i32, i32
  }
  func.func @transform_9(%arg0: i32) -> (i32, i32, i32) {
    %c0_i32 = arith.constant 0 : i32
    %c0_i32_0 = arith.constant 0 : i32
    %c0_i32_1 = arith.constant 0 : i32
    return %arg0, %c0_i32, %c0_i32_0 : i32, i32, i32
  }
}

</mosaic_0001>

<llo_original>
// kernel: tpu_custom_call.1
$region0: #{tpu_custom_call.1}
  #allocation0 [shape = 'u32[]', space=smem, size = 0x4, offset = 0x4, fixed_abs, tag = 'smem constant byte address 0x4 - core index']
  #allocation1 [shape = 'u32[144,128]{1,0:T(1,128)}', space=vmem, size = 0x12000, scoped, tag = 'internal scratch']
  #allocation2 [shape = 'f32[32,128]{1,0:T(8,128)}', space=vmem, size = 0x4000, scoped, tag = 'scratch operand']
  %s0 = inlined_call_operand.vmem [shape: f32[2,4,128], index: 0, kind: input, shape index: {}]
  %s1 = inlined_call_operand.vmem [shape: s32[1,128], index: 1, kind: input, shape index: {}]
  %s2 = inlined_call_operand.vmem [shape: s32[128,1], index: 2, kind: input, shape index: {}]
  %s3 = inlined_call_operand.vmem [shape: f32[4,4], index: 3, kind: input, shape index: {}]
  %s4 = inlined_call_operand.vmem [shape: f32[4,1], index: 4, kind: input, shape index: {}]
  %s5 = inlined_call_operand.vmem [shape: f32[4,4], index: 5, kind: input, shape index: {}]
  %s6 = inlined_call_operand.vmem [shape: f32[4,1], index: 6, kind: input, shape index: {}]
  %s7 = inlined_call_operand.vmem [shape: f32[8,32], index: 7, kind: input, shape index: {}]
  %s8 = inlined_call_operand.vmem [shape: f32[8,1], index: 8, kind: input, shape index: {}]
  %s9 = inlined_call_operand.hbm [shape: f32[2,8,128], index: 9, kind: output, shape index: {}]
  %s10 = sld [smem:[#allocation0]]
  $region69: #{tpu_custom_call.1} parent=0
    _
  %s12 = ssub.s32 1, %s10
  %s13 = scalar_select 0, %s12, %s10
  $region1: #{tpu_custom_call.1} parent=0
    #allocation3 [shape = 'u8[8192]{0}', space=vmem, size = 0x2000, scoped, tag = 'output window, operand 0']
    #allocation4 [shape = 's32[2]{0}', space=sflag, size = 0x8, scoped, tag = 'scoped memory for tpu_custom_call.1']
    %14 = vsyncpa [#allocation4], 0
    %s15 = scalar_lea.sflag [#allocation4], 1
    %16 = vsyncpa %s15, 0
    loop: start=0, step=1, limit=4
    $region2: #{tpu_custom_call.1} parent=1 // loop_pre_header
      _
    $region3: #{tpu_custom_call.1} parent=1 // loop_header
      %s18 = sphi 0, %s22
      %p19 = scmp.ge.s32.totalorder %s18, 4
      %s28 = sphi 0, %s30
      %s31 = sphi 0, %s28
      %s32 = sphi 0, %s31
      %s48 = sphi 0, %s32
      %s52 = sphi 0, %s52
      %s54 = sphi 0, %s52
      %s55 = sphi 0, %s54
      %s69 = sphi 0, %s55
      %s73 = sphi 0, %s73
      %s75 = sphi 0, %s73
      %s76 = sphi 0, %s75
      %s90 = sphi 0, %s76
      %s94 = sphi 0, %s94
      %s96 = sphi 0, %s94
      %s97 = sphi 0, %s96
      %s111 = sphi 0, %s97
      %s115 = sphi 0, %s115
      %s117 = sphi 0, %s115
      %s118 = sphi 0, %s117
      %s132 = sphi 0, %s118
      %s136 = sphi 0, %s136
      %s138 = sphi 0, %s136
      %s139 = sphi 0, %s138
      %s153 = sphi 0, %s139
      %s157 = sphi 0, %s157
      %s159 = sphi 0, %s157
      %s160 = sphi 0, %s159
      %s174 = sphi 0, %s160
      %s178 = sphi 0, %s178
      %s180 = sphi 0, %s178
      %s181 = sphi 0, %s180
      %s195 = sphi 0, %s181
      %s199 = sphi 0, %s199
      %s201 = sphi 0, %s199
      %s202 = sphi 0, %s201
      %s216 = sphi 0, %s202
      %s222 = sphi 0, %s224
      %s225 = sphi 0, %s222
      %s226 = sphi 0, %s225
      %s242 = sphi 0, %s226
    $region4: #{tpu_custom_call.1} parent=1 // loop_header_branch
      %21 = sbr.rel (%p19) target = $region8
    $region5: #{tpu_custom_call.1} parent=1 // loop_body
      %s23 = ssub.s32 %s18, 1
      %s24 = ssub.s32 %s18, 2
      %s25 = sadd.s32 %s18, 1
      %s26 = ssub.s32 %s18, %s25
      %p27 = scmp.eq.s32.totalorder %s26, 0
      %s29 = sadd.s32 %s28, 1
      %s30 = scalar_select %p27, %s28, %s29
      %p33 = pneg %p27
      %p34 = scmp.eq.s32.totalorder %s18, 1
      %p35 = por %p33, %p34
      %p36 = scmp.ne.s32.totalorder %s28, %s31
      %p37 = scmp.eq.s32.totalorder %s18, 0
      %p38 = por %p36, %p37
      %p39 = scmp.ne.s32.totalorder %s28, %s31
      %p40 = scmp.eq.s32.totalorder %s23, 1
      %p41 = por %p39, %p40
      %p42 = scmp.ne.s32.totalorder %s31, %s32
      %p43 = scmp.eq.s32.totalorder %s23, 0
      %p44 = por %p42, %p43
      %p45 = scmp.ne.s32.totalorder %s31, %s32
      %p46 = scmp.eq.s32.totalorder %s24, 1
      %p47 = por %p45, %p46
      %p49 = scmp.ne.s32.totalorder %s32, %s48
      %p50 = scmp.eq.s32.totalorder %s24, 0
      %p51 = por %p49, %p50
      %s53 = sadd.s32 %s52, 1
      %p56 = scmp.eq.s32.totalorder %s18, 1
      %p57 = scmp.ne.s32.totalorder %s52, %s54
      %p58 = scmp.eq.s32.totalorder %s18, 0
      %p59 = por %p57, %p58
      %p60 = scmp.ne.s32.totalorder %s52, %s54
      %p61 = scmp.eq.s32.totalorder %s23, 1
      %p62 = por %p60, %p61
      %p63 = scmp.ne.s32.totalorder %s54, %s55
      %p64 = scmp.eq.s32.totalorder %s23, 0
      %p65 = por %p63, %p64
      %p66 = scmp.ne.s32.totalorder %s54, %s55
      %p67 = scmp.eq.s32.totalorder %s24, 1
      %p68 = por %p66, %p67
      %p70 = scmp.ne.s32.totalorder %s55, %s69
      %p71 = scmp.eq.s32.totalorder %s24, 0
      %p72 = por %p70, %p71
      %s74 = sadd.s32 %s73, 1
      %p77 = scmp.eq.s32.totalorder %s18, 1
      %p78 = scmp.ne.s32.totalorder %s73, %s75
      %p79 = scmp.eq.s32.totalorder %s18, 0
      %p80 = por %p78, %p79
      %p81 = scmp.ne.s32.totalorder %s73, %s75
      %p82 = scmp.eq.s32.totalorder %s23, 1
      %p83 = por %p81, %p82
      %p84 = scmp.ne.s32.totalorder %s75, %s76
      %p85 = scmp.eq.s32.totalorder %s23, 0
      %p86 = por %p84, %p85
      %p87 = scmp.ne.s32.totalorder %s75, %s76
      %p88 = scmp.eq.s32.totalorder %s24, 1
      %p89 = por %p87, %p88
      %p91 = scmp.ne.s32.totalorder %s76, %s90
      %p92 = scmp.eq.s32.totalorder %s24, 0
      %p93 = por %p91, %p92
      %s95 = sadd.s32 %s94, 1
      %p98 = scmp.eq.s32.totalorder %s18, 1
      %p99 = scmp.ne.s32.totalorder %s94, %s96
      %p100 = scmp.eq.s32.totalorder %s18, 0
      %p101 = por %p99, %p100
      %p102 = scmp.ne.s32.totalorder %s94, %s96
      %p103 = scmp.eq.s32.totalorder %s23, 1
      %p104 = por %p102, %p103
      %p105 = scmp.ne.s32.totalorder %s96, %s97
      %p106 = scmp.eq.s32.totalorder %s23, 0
      %p107 = por %p105, %p106
      %p108 = scmp.ne.s32.totalorder %s96, %s97
      %p109 = scmp.eq.s32.totalorder %s24, 1
      %p110 = por %p108, %p109
      %p112 = scmp.ne.s32.totalorder %s97, %s111
      %p113 = scmp.eq.s32.totalorder %s24, 0
      %p114 = por %p112, %p113
      %s116 = sadd.s32 %s115, 1
      %p119 = scmp.eq.s32.totalorder %s18, 1
      %p120 = scmp.ne.s32.totalorder %s115, %s117
      %p121 = scmp.eq.s32.totalorder %s18, 0
      %p122 = por %p120, %p121
      %p123 = scmp.ne.s32.totalorder %s115, %s117
      %p124 = scmp.eq.s32.totalorder %s23, 1
      %p125 = por %p123, %p124
      %p126 = scmp.ne.s32.totalorder %s117, %s118
      %p127 = scmp.eq.s32.totalorder %s23, 0
      %p128 = por %p126, %p127
      %p129 = scmp.ne.s32.totalorder %s117, %s118
      %p130 = scmp.eq.s32.totalorder %s24, 1
      %p131 = por %p129, %p130
      %p133 = scmp.ne.s32.totalorder %s118, %s132
      %p134 = scmp.eq.s32.totalorder %s24, 0
      %p135 = por %p133, %p134
      %s137 = sadd.s32 %s136, 1
      %p140 = scmp.eq.s32.totalorder %s18, 1
      %p141 = scmp.ne.s32.totalorder %s136, %s138
      %p142 = scmp.eq.s32.totalorder %s18, 0
      %p143 = por %p141, %p142
      %p144 = scmp.ne.s32.totalorder %s136, %s138
      %p145 = scmp.eq.s32.totalorder %s23, 1
      %p146 = por %p144, %p145
      %p147 = scmp.ne.s32.totalorder %s138, %s139
      %p148 = scmp.eq.s32.totalorder %s23, 0
      %p149 = por %p147, %p148
      %p150 = scmp.ne.s32.totalorder %s138, %s139
      %p151 = scmp.eq.s32.totalorder %s24, 1
      %p152 = por %p150, %p151
      %p154 = scmp.ne.s32.totalorder %s139, %s153
      %p155 = scmp.eq.s32.totalorder %s24, 0
      %p156 = por %p154, %p155
      %s158 = sadd.s32 %s157, 1
      %p161 = scmp.eq.s32.totalorder %s18, 1
      %p162 = scmp.ne.s32.totalorder %s157, %s159
      %p163 = scmp.eq.s32.totalorder %s18, 0
      %p164 = por %p162, %p163
      %p165 = scmp.ne.s32.totalorder %s157, %s159
      %p166 = scmp.eq.s32.totalorder %s23, 1
      %p167 = por %p165, %p166
      %p168 = scmp.ne.s32.totalorder %s159, %s160
      %p169 = scmp.eq.s32.totalorder %s23, 0
      %p170 = por %p168, %p169
      %p171 = scmp.ne.s32.totalorder %s159, %s160
      %p172 = scmp.eq.s32.totalorder %s24, 1
      %p173 = por %p171, %p172
      %p175 = scmp.ne.s32.totalorder %s160, %s174
      %p176 = scmp.eq.s32.totalorder %s24, 0
      %p177 = por %p175, %p176
      %s179 = sadd.s32 %s178, 1
      %p182 = scmp.eq.s32.totalorder %s18, 1
      %p183 = scmp.ne.s32.totalorder %s178, %s180
      %p184 = scmp.eq.s32.totalorder %s18, 0
      %p185 = por %p183, %p184
      %p186 = scmp.ne.s32.totalorder %s178, %s180
      %p187 = scmp.eq.s32.totalorder %s23, 1
      %p188 = por %p186, %p187
      %p189 = scmp.ne.s32.totalorder %s180, %s181
      %p190 = scmp.eq.s32.totalorder %s23, 0
      %p191 = por %p189, %p190
      %p192 = scmp.ne.s32.totalorder %s180, %s181
      %p193 = scmp.eq.s32.totalorder %s24, 1
      %p194 = por %p192, %p193
      %p196 = scmp.ne.s32.totalorder %s181, %s195
      %p197 = scmp.eq.s32.totalorder %s24, 0
      %p198 = por %p196, %p197
      %s200 = sadd.s32 %s199, 1
      %p203 = scmp.eq.s32.totalorder %s18, 1
      %p204 = scmp.ne.s32.totalorder %s199, %s201
      %p205 = scmp.eq.s32.totalorder %s18, 0
      %p206 = por %p204, %p205
      %p207 = scmp.ne.s32.totalorder %s199, %s201
      %p208 = scmp.eq.s32.totalorder %s23, 1
      %p209 = por %p207, %p208
      %p210 = scmp.ne.s32.totalorder %s201, %s202
      %p211 = scmp.eq.s32.totalorder %s23, 0
      %p212 = por %p210, %p211
      %p213 = scmp.ne.s32.totalorder %s201, %s202
      %p214 = scmp.eq.s32.totalorder %s24, 1
      %p215 = por %p213, %p214
      %p217 = scmp.ne.s32.totalorder %s202, %s216
      %p218 = scmp.eq.s32.totalorder %s24, 0
      %p219 = por %p217, %p218
      %s220 = ssub.s32 %s18, %s25
      %p221 = scmp.eq.s32.totalorder %s220, 0
      %s223 = sadd.s32 %s222, 1
      %s224 = scalar_select %p221, %s222, %s223
      %p227 = pneg %p221
      %p228 = scmp.eq.s32.totalorder %s18, 1
      %p229 = por %p227, %p228
      %p230 = scmp.ne.s32.totalorder %s222, %s225
      %p231 = scmp.eq.s32.totalorder %s18, 0
      %p232 = por %p230, %p231
      %p233 = scmp.ne.s32.totalorder %s222, %s225
      %p234 = scmp.eq.s32.totalorder %s23, 1
      %p235 = por %p233, %p234
      %p236 = scmp.ne.s32.totalorder %s225, %s226
      %p237 = scmp.eq.s32.totalorder %s23, 0
      %p238 = por %p236, %p237
      %p239 = scmp.ne.s32.totalorder %s225, %s226
      %p240 = scmp.eq.s32.totalorder %s24, 1
      %p241 = por %p239, %p240
      %p243 = scmp.ne.s32.totalorder %s226, %s242
      %p244 = scmp.eq.s32.totalorder %s24, 0
      %p245 = por %p243, %p244
      %p246 = scmp.le.s32.totalorder 1, %s18
      %p247 = scmp.lt.s32.totalorder %s18, 3
      %p248 = pnand %p246, %p247
      %p249 = pneg %p248
      // Predicated region
      $region9: #{tpu_custom_call.1} parent=5 // pred_check
        _
      $region10: #{tpu_custom_call.1} parent=5 // pred_check_branch
        %251 = sbr.rel (%p248) target = $region12
      $region11: #{tpu_custom_call.1} parent=5 // pred_region
        %s252 = ssub.s32 %s18, 1
        // Predicated region
        $region13: #{tpu_custom_call.1} parent=11 // pred_check
          %p253 = pneg %p65
        $region14: #{tpu_custom_call.1} parent=11 // pred_check_branch
          %255 = sbr.rel (%p253) target = $region16
        $region15: #{tpu_custom_call.1} parent=11 // pred_region
          _
        $region16: #{tpu_custom_call.1} parent=11 // pred_fallthru
          _
        // Predicated region
        $region17: #{tpu_custom_call.1} parent=11 // pred_check
          %p256 = pneg %p86
        $region18: #{tpu_custom_call.1} parent=11 // pred_check_branch
          %258 = sbr.rel (%p256) target = $region20
        $region19: #{tpu_custom_call.1} parent=11 // pred_region
          _
        $region20: #{tpu_custom_call.1} parent=11 // pred_fallthru
          _
        // Predicated region
        $region21: #{tpu_custom_call.1} parent=11 // pred_check
          %p259 = pneg %p107
        $region22: #{tpu_custom_call.1} parent=11 // pred_check_branch
          %261 = sbr.rel (%p259) target = $region24
        $region23: #{tpu_custom_call.1} parent=11 // pred_region
          _
        $region24: #{tpu_custom_call.1} parent=11 // pred_fallthru
          _
        // Predicated region
        $region25: #{tpu_custom_call.1} parent=11 // pred_check
          %p262 = pneg %p128
        $region26: #{tpu_custom_call.1} parent=11 // pred_check_branch
          %264 = sbr.rel (%p262) target = $region28
        $region27: #{tpu_custom_call.1} parent=11 // pred_region
          _
        $region28: #{tpu_custom_call.1} parent=11 // pred_fallthru
          _
        // Predicated region
        $region29: #{tpu_custom_call.1} parent=11 // pred_check
          %p265 = pneg %p149
        $region30: #{tpu_custom_call.1} parent=11 // pred_check_branch
          %267 = sbr.rel (%p265) target = $region32
        $region31: #{tpu_custom_call.1} parent=11 // pred_region
          _
        $region32: #{tpu_custom_call.1} parent=11 // pred_fallthru
          _
        // Predicated region
        $region33: #{tpu_custom_call.1} parent=11 // pred_check
          %p268 = pneg %p170
        $region34: #{tpu_custom_call.1} parent=11 // pred_check_branch
          %270 = sbr.rel (%p268) target = $region36
        $region35: #{tpu_custom_call.1} parent=11 // pred_region
          _
        $region36: #{tpu_custom_call.1} parent=11 // pred_fallthru
          _
        // Predicated region
        $region37: #{tpu_custom_call.1} parent=11 // pred_check
          %p271 = pneg %p191
        $region38: #{tpu_custom_call.1} parent=11 // pred_check_branch
          %273 = sbr.rel (%p271) target = $region40
        $region39: #{tpu_custom_call.1} parent=11 // pred_region
          _
        $region40: #{tpu_custom_call.1} parent=11 // pred_fallthru
          _
        // Predicated region
        $region41: #{tpu_custom_call.1} parent=11 // pred_check
          %p274 = pneg %p212
        $region42: #{tpu_custom_call.1} parent=11 // pred_check_branch
          %276 = sbr.rel (%p274) target = $region44
        $region43: #{tpu_custom_call.1} parent=11 // pred_region
          _
        $region44: #{tpu_custom_call.1} parent=11 // pred_fallthru
          _
      $region12: #{tpu_custom_call.1} parent=5 // pred_fallthru
        _
      %p277 = scmp.lt.s32.totalorder %s18, 2
      // Predicated region
      $region45: #{tpu_custom_call.1} parent=5 // pred_check
        %p278 = pneg %p277
      $region46: #{tpu_custom_call.1} parent=5 // pred_check_branch
        %280 = sbr.rel (%p278) target = $region48
      $region47: #{tpu_custom_call.1} parent=5 // pred_region
        // Predicated region
        $region49: #{tpu_custom_call.1} parent=47 // pred_check
          %p281 = pneg %p38
        $region50: #{tpu_custom_call.1} parent=47 // pred_check_branch
          %283 = sbr.rel (%p281) target = $region52
        $region51: #{tpu_custom_call.1} parent=47 // pred_region
          %p284 = scmp.lt.s32.totalorder %s18, 1
          %s285 = scalar_select %p284, %s18, 1
          %s286 = smul.addr %s285, 4
          %s287 = scalar_lea.vmem %s0, %s286
        $region52: #{tpu_custom_call.1} parent=47 // pred_fallthru
          _
      $region48: #{tpu_custom_call.1} parent=5 // pred_fallthru
        _
      %p288 = scmp.le.s32.totalorder 1, %s18
      %p289 = scmp.lt.s32.totalorder %s18, 3
      %p290 = pnand %p288, %p289
      %p291 = pneg %p290
      // Predicated region
      $region53: #{tpu_custom_call.1} parent=5 // pred_check
        _
      $region54: #{tpu_custom_call.1} parent=5 // pred_check_branch
        %293 = sbr.rel (%p290) target = $region56
      $region55: #{tpu_custom_call.1} parent=5 // pred_region
        %s294 = ssub.s32 %s18, 1
        %p295 = scmp.lt.s32.totalorder %s23, 1
        %s296 = scalar_select %p295, %s23, 1
        %s297 = smul.addr %s296, 4
        %s298 = scalar_lea.vmem %s0, %s297
        %p299 = pneg %p44
        %p300 = pneg %p41
        %p301 = pneg %p65
        %p302 = pneg %p62
        %p303 = pneg %p86
        %p304 = pneg %p83
        %p305 = pneg %p107
        %p306 = pneg %p104
        %p307 = pneg %p128
        %p308 = pneg %p125
        %p309 = pneg %p149
        %p310 = pneg %p146
        %p311 = pneg %p170
        %p312 = pneg %p167
        %p313 = pneg %p191
        %p314 = pneg %p188
        %p315 = pneg %p212
        %p316 = pneg %p209
        %p317 = pneg %p238
        %p318 = pneg %p235
        %s319 = sand.u32 %s225, 1
        %s320 = scalar_lea.sflag [#allocation4], %s319
        %s321 = sand.u32 %s225, 1
        %s322 = smul.addr %s321, 8
        %s323 = scalar_lea.vmem [#allocation3], %s322
        %p324 = scmp.lt.s32.totalorder %s23, 1
        %s325 = scalar_select %p324, %s23, 1
        %s326 = smul.addr %s325, 4
        %s327 = scalar_lea.vmem %s0, %s326
        %v328 = vld [vmem:[%s3] sm:$0xf]
        %v329 = vld [vmem:[%s5] sm:$0xf]
        %v330 = vld [vmem:[%s4] sm:$0xf]
        %v331 = vld [vmem:[%s6] sm:$0xf]
        %v332 = vld [vmem:[%s7] sm:$0xff]
        %v333 = vld [vmem:[%s8] sm:$0xff]
        %v334 = vld [vmem:[%s2] sm:$0xff]
        %v335 = vld [vmem:[%s2 + $0x8] sm:$0xff]
        %v336 = vld [vmem:[%s2 + $0x10] sm:$0xff]
        %v337 = vld [vmem:[%s2 + $0x18] sm:$0xff]
        %v338 = vld [vmem:[%s2 + $0x20] sm:$0xff]
        %v339 = vld [vmem:[%s2 + $0x28] sm:$0xff]
        %v340 = vld [vmem:[%s2 + $0x30] sm:$0xff]
        %v341 = vld [vmem:[%s2 + $0x38] sm:$0xff]
        %v342 = vld [vmem:[%s2 + $0x40] sm:$0xff]
        %v343 = vld [vmem:[%s2 + $0x48] sm:$0xff]
        %v344 = vld [vmem:[%s2 + $0x50] sm:$0xff]
        %v345 = vld [vmem:[%s2 + $0x58] sm:$0xff]
        %v346 = vld [vmem:[%s2 + $0x60] sm:$0xff]
        %v347 = vld [vmem:[%s2 + $0x68] sm:$0xff]
        %v348 = vld [vmem:[%s2 + $0x70] sm:$0xff]
        %v349 = vld [vmem:[%s2 + $0x78] sm:$0xff]
        %v350 = vld [vmem:[%s1] sm:$0x1]
        %351 = vset.pattern.permute.xlu0 0
        %352 = vperm.xlu0 %351, %v334
        %v353 = vpop.permute.xlu0 %352
        %354 = vset.pattern.permute.xlu0 0
        %355 = vperm.xlu0 %354, %v335
        %v356 = vpop.permute.xlu0 %355
        %357 = vset.pattern.permute.xlu0 0
        %358 = vperm.xlu0 %357, %v336
        %v359 = vpop.permute.xlu0 %358
        %360 = vset.pattern.permute.xlu0 0
        %361 = vperm.xlu0 %360, %v337
        %v362 = vpop.permute.xlu0 %361
        %363 = vset.pattern.permute.xlu0 0
        %364 = vperm.xlu0 %363, %v338
        %v365 = vpop.permute.xlu0 %364
        %366 = vset.pattern.permute.xlu0 0
        %367 = vperm.xlu0 %366, %v339
        %v368 = vpop.permute.xlu0 %367
        %369 = vset.pattern.permute.xlu0 0
        %370 = vperm.xlu0 %369, %v340
        %v371 = vpop.permute.xlu0 %370
        %372 = vset.pattern.permute.xlu0 0
        %373 = vperm.xlu0 %372, %v341
        %v374 = vpop.permute.xlu0 %373
        %375 = vset.pattern.permute.xlu0 0
        %376 = vperm.xlu0 %375, %v342
        %v377 = vpop.permute.xlu0 %376
        %378 = vset.pattern.permute.xlu0 0
        %379 = vperm.xlu0 %378, %v343
        %v380 = vpop.permute.xlu0 %379
        %381 = vset.pattern.permute.xlu0 0
        %382 = vperm.xlu0 %381, %v344
        %v383 = vpop.permute.xlu0 %382
        %384 = vset.pattern.permute.xlu0 0
        %385 = vperm.xlu0 %384, %v345
        %v386 = vpop.permute.xlu0 %385
        %387 = vset.pattern.permute.xlu0 0
        %388 = vperm.xlu0 %387, %v346
        %v389 = vpop.permute.xlu0 %388
        %390 = vset.pattern.permute.xlu0 0
        %391 = vperm.xlu0 %390, %v347
        %v392 = vpop.permute.xlu0 %391
        %393 = vset.pattern.permute.xlu0 0
        %394 = vperm.xlu0 %393, %v348
        %v395 = vpop.permute.xlu0 %394
        %396 = vset.pattern.permute.xlu0 0
        %397 = vperm.xlu0 %396, %v349
        %v398 = vpop.permute.xlu0 %397
        %v399 = vlaneseq
        %v400 = vshrl.u32 %v399, 7
        %v401 = vsub.s32 0, %v400
        %v402 = vrot.slane %v350, %v401
        %vm403 = vcmp.eq.s32.totalorder %v353, %v402
        %vm404 = vcmp.eq.s32.totalorder %v356, %v402
        %vm405 = vcmp.eq.s32.totalorder %v359, %v402
        %vm406 = vcmp.eq.s32.totalorder %v362, %v402
        %vm407 = vcmp.eq.s32.totalorder %v365, %v402
        %vm408 = vcmp.eq.s32.totalorder %v368, %v402
        %vm409 = vcmp.eq.s32.totalorder %v371, %v402
        %vm410 = vcmp.eq.s32.totalorder %v374, %v402
        %vm411 = vcmp.eq.s32.totalorder %v377, %v402
        %vm412 = vcmp.eq.s32.totalorder %v380, %v402
        %vm413 = vcmp.eq.s32.totalorder %v383, %v402
        %vm414 = vcmp.eq.s32.totalorder %v386, %v402
        %vm415 = vcmp.eq.s32.totalorder %v389, %v402
        %vm416 = vcmp.eq.s32.totalorder %v392, %v402
        %vm417 = vcmp.eq.s32.totalorder %v395, %v402
        %vm418 = vcmp.eq.s32.totalorder %v398, %v402
        %v419 = vld [vmem:[%s327] sm:$0xf]
        %421 = vset.pattern.permute.xlu0 0
        %422 = vperm.xlu0 %421, %v330
        %v423 = vpop.permute.xlu0 %422
        %vm425 = vcmask 31744
        %v427 = vsel %vm425, %v328, 0
        %vm429 = vcmask 1043456
        %v431 = vsel %vm429, %v419, 0
        %433 = vmatprep.subr.mxu0 0.0
        %434 = vmatpush1.msra.mxu0 %v431
        %435 = vmatprep.subr.mxu0 0.0
        %436 = vmatpush1.msra.mxu0 0.0
        %437 = vmatprep.subr.mxu0 0.0
        %438 = vmatpush1.msra.mxu0 0.0
        %439 = vmatprep.subr.mxu0 0.0
        %440 = vmatpush1.msra.mxu0 0.0
        %441 = vmatprep.subr.mxu0 0.0
        %442 = vmatpush1.msra.mxu0 0.0
        %443 = vmatprep.subr.mxu0 0.0
        %444 = vmatpush1.msra.mxu0 0.0
        %445 = vmatprep.subr.mxu0 0.0
        %446 = vmatpush1.msra.mxu0 0.0
        %447 = vmatprep.subr.mxu0 0.0
        %448 = vmatpush1.msra.mxu0 0.0
        %449 = vmatprep.subr.mxu0 0.0
        %450 = vmatpush1.msra.mxu0 0.0
        %451 = vmatprep.subr.mxu0 0.0
        %452 = vmatpush1.msra.mxu0 0.0
        %453 = vmatprep.subr.mxu0 0.0
        %454 = vmatpush1.msra.mxu0 0.0
        %455 = vmatprep.subr.mxu0 0.0
        %456 = vmatpush1.msra.mxu0 0.0
        %457 = vmatprep.subr.mxu0 0.0
        %458 = vmatpush1.msra.mxu0 0.0
        %459 = vmatprep.subr.mxu0 0.0
        %460 = vmatpush1.msra.mxu0 0.0
        %461 = vmatprep.subr.mxu0 0.0
        %462 = vmatpush1.msra.mxu0 0.0
        %463 = vmatprep.subr.mxu0 0.0
        %464 = vmatpush1.msra.mxu0 0.0
        %465 = vmatprep.subr.mxu0 0.0
        %466 = vmatpush1.msra.mxu0 0.0
        %467 = vmatprep.subr.mxu0 0.0
        %468 = vmatpush1.msra.mxu0 0.0
        %469 = vmatprep.subr.mxu0 0.0
        %470 = vmatpush1.msra.mxu0 0.0
        %471 = vmatprep.subr.mxu0 0.0
        %472 = vmatpush1.msra.mxu0 0.0
        %473 = vmatprep.subr.mxu0 0.0
        %474 = vmatpush1.msra.mxu0 0.0
        %475 = vmatprep.subr.mxu0 0.0
        %476 = vmatpush1.msra.mxu0 0.0
        %477 = vmatprep.subr.mxu0 0.0
        %478 = vmatpush1.msra.mxu0 0.0
        %479 = vmatprep.subr.mxu0 0.0
        %480 = vmatpush1.msra.mxu0 0.0
        %481 = vmatprep.subr.mxu0 0.0
        %482 = vmatpush1.msra.mxu0 0.0
        %483 = vmatprep.subr.mxu0 0.0
        %484 = vmatpush1.msra.mxu0 0.0
        %485 = vmatprep.subr.mxu0 0.0
        %486 = vmatpush1.msra.mxu0 0.0
        %487 = vmatprep.subr.mxu0 0.0
        %488 = vmatpush1.msra.mxu0 0.0
        %489 = vmatprep.subr.mxu0 0.0
        %490 = vmatpush1.msra.mxu0 0.0
        %491 = vmatprep.subr.mxu0 0.0
        %492 = vmatpush1.msra.mxu0 0.0
        %493 = vmatprep.subr.mxu0 0.0
        %494 = vmatpush1.msra.mxu0 0.0
        %495 = vmatprep.subr.mxu0 0.0
        %496 = vmatpush1.msra.mxu0 0.0
        %497 = vmatprep.mubr.f32.mxu0 0.0
        %498 = vmatmul.mubr.f32.gmra.mrb[0].mxu0 %v427
        %v499 = vpop.f32.mrb[0].mxu0
        %v500 = vadd.f32 %v423, %v499
        %v501 = vpop.f32.mrb[0].mxu0
        %502 = vdwg.mxu0
        %v503 = vtanh.pop %v500
        %505 = vset.pattern.permute.xlu0 0
        %506 = vperm.xlu0 %505, %v331
        %v507 = vpop.permute.xlu0 %506
        %v510 = vsel %vm425, %v329, 0
        %512 = vmatprep.subr.mxu0 0.0
        %513 = vmatpush1.msra.mxu0 %v431
        %514 = vmatprep.subr.mxu0 0.0
        %515 = vmatpush1.msra.mxu0 0.0
        %516 = vmatprep.subr.mxu0 0.0
        %517 = vmatpush1.msra.mxu0 0.0
        %518 = vmatprep.subr.mxu0 0.0
        %519 = vmatpush1.msra.mxu0 0.0
        %520 = vmatprep.subr.mxu0 0.0
        %521 = vmatpush1.msra.mxu0 0.0
        %522 = vmatprep.subr.mxu0 0.0
        %523 = vmatpush1.msra.mxu0 0.0
        %524 = vmatprep.subr.mxu0 0.0
        %525 = vmatpush1.msra.mxu0 0.0
        %526 = vmatprep.subr.mxu0 0.0
        %527 = vmatpush1.msra.mxu0 0.0
        %528 = vmatprep.subr.mxu0 0.0
        %529 = vmatpush1.msra.mxu0 0.0
        %530 = vmatprep.subr.mxu0 0.0
        %531 = vmatpush1.msra.mxu0 0.0
        %532 = vmatprep.subr.mxu0 0.0
        %533 = vmatpush1.msra.mxu0 0.0
        %534 = vmatprep.subr.mxu0 0.0
        %535 = vmatpush1.msra.mxu0 0.0
        %536 = vmatprep.subr.mxu0 0.0
        %537 = vmatpush1.msra.mxu0 0.0
        %538 = vmatprep.subr.mxu0 0.0
        %539 = vmatpush1.msra.mxu0 0.0
        %540 = vmatprep.subr.mxu0 0.0
        %541 = vmatpush1.msra.mxu0 0.0
        %542 = vmatprep.subr.mxu0 0.0
        %543 = vmatpush1.msra.mxu0 0.0
        %544 = vmatprep.subr.mxu0 0.0
        %545 = vmatpush1.msra.mxu0 0.0
        %546 = vmatprep.subr.mxu0 0.0
        %547 = vmatpush1.msra.mxu0 0.0
        %548 = vmatprep.subr.mxu0 0.0
        %549 = vmatpush1.msra.mxu0 0.0
        %550 = vmatprep.subr.mxu0 0.0
        %551 = vmatpush1.msra.mxu0 0.0
        %552 = vmatprep.subr.mxu0 0.0
        %553 = vmatpush1.msra.mxu0 0.0
        %554 = vmatprep.subr.mxu0 0.0
        %555 = vmatpush1.msra.mxu0 0.0
        %556 = vmatprep.subr.mxu0 0.0
        %557 = vmatpush1.msra.mxu0 0.0
        %558 = vmatprep.subr.mxu0 0.0
        %559 = vmatpush1.msra.mxu0 0.0
        %560 = vmatprep.subr.mxu0 0.0
        %561 = vmatpush1.msra.mxu0 0.0
        %562 = vmatprep.subr.mxu0 0.0
        %563 = vmatpush1.msra.mxu0 0.0
        %564 = vmatprep.subr.mxu0 0.0
        %565 = vmatpush1.msra.mxu0 0.0
        %566 = vmatprep.subr.mxu0 0.0
        %567 = vmatpush1.msra.mxu0 0.0
        %568 = vmatprep.subr.mxu0 0.0
        %569 = vmatpush1.msra.mxu0 0.0
        %570 = vmatprep.subr.mxu0 0.0
        %571 = vmatpush1.msra.mxu0 0.0
        %572 = vmatprep.subr.mxu0 0.0
        %573 = vmatpush1.msra.mxu0 0.0
        %574 = vmatprep.subr.mxu0 0.0
        %575 = vmatpush1.msra.mxu0 0.0
        %576 = vmatprep.mubr.f32.mxu0 0.0
        %577 = vmatmul.mubr.f32.gmra.mrb[0].mxu0 %v510
        %v578 = vpop.f32.mrb[0].mxu0
        %v579 = vadd.f32 %v507, %v578
        %v580 = vpop.f32.mrb[0].mxu0
        %581 = vdwg.mxu0
        %v582 = vtanh.pop %v579
        %583 = vxpose.xlu0.b32.start [1/16] %v503, 128
        %584 = vxpose.xlu0.b32.cont [2/16] 0.0, 128
        %585 = vxpose.xlu0.b32.cont [3/16] 0.0, 128
        %586 = vxpose.xlu0.b32.cont [4/16] 0.0, 128
        %587 = vxpose.xlu0.b32.cont [5/16] 0.0, 128
        %588 = vxpose.xlu0.b32.cont [6/16] 0.0, 128
        %589 = vxpose.xlu0.b32.cont [7/16] 0.0, 128
        %590 = vxpose.xlu0.b32.cont [8/16] 0.0, 128
        %591 = vxpose.xlu0.b32.cont [9/16] 0.0, 128
        %592 = vxpose.xlu0.b32.cont [10/16] 0.0, 128
        %593 = vxpose.xlu0.b32.cont [11/16] 0.0, 128
        %594 = vxpose.xlu0.b32.cont [12/16] 0.0, 128
        %595 = vxpose.xlu0.b32.cont [13/16] 0.0, 128
        %596 = vxpose.xlu0.b32.cont [14/16] 0.0, 128
        %597 = vxpose.xlu0.b32.cont [15/16] 0.0, 128
        %598 = vxpose.xlu0.b32.end [16/16] 0.0, 128
        %v599 = vpop.trf.xlu0
        %v600 = vpop.trf.xlu0
        %v601 = vpop.trf.xlu0
        %v602 = vpop.trf.xlu0
        %v603 = vpop.trf.xlu0
        %v604 = vpop.trf.xlu0
        %v605 = vpop.trf.xlu0
        %v606 = vpop.trf.xlu0
        %v607 = vpop.trf.xlu0
        %v608 = vpop.trf.xlu0
        %v609 = vpop.trf.xlu0
        %v610 = vpop.trf.xlu0
        %v611 = vpop.trf.xlu0
        %v612 = vpop.trf.xlu0
        %v613 = vpop.trf.xlu0
        %v614 = vpop.trf.xlu0
        %v616 = vsel %vm425, %v599, 0
        %v619 = vsel %vm425, %v600, 0
        %v622 = vsel %vm425, %v601, 0
        %v625 = vsel %vm425, %v602, 0
        %v628 = vsel %vm425, %v603, 0
        %v631 = vsel %vm425, %v604, 0
        %v634 = vsel %vm425, %v605, 0
        %v637 = vsel %vm425, %v606, 0
        %v640 = vsel %vm425, %v607, 0
        %v643 = vsel %vm425, %v608, 0
        %v646 = vsel %vm425, %v609, 0
        %v649 = vsel %vm425, %v610, 0
        %v652 = vsel %vm425, %v611, 0
        %v655 = vsel %vm425, %v612, 0
        %v658 = vsel %vm425, %v613, 0
        %v661 = vsel %vm425, %v614, 0
        %v664 = vsel %vm429, %v582, 0
        %666 = vmatprep.subr.mxu0 0.0
        %667 = vmatpush1.msra.mxu0 %v664
        %668 = vmatprep.subr.mxu0 0.0
        %669 = vmatpush1.msra.mxu0 0.0
        %670 = vmatprep.subr.mxu0 0.0
        %671 = vmatpush1.msra.mxu0 0.0
        %672 = vmatprep.subr.mxu0 0.0
        %673 = vmatpush1.msra.mxu0 0.0
        %674 = vmatprep.subr.mxu0 0.0
        %675 = vmatpush1.msra.mxu0 0.0
        %676 = vmatprep.subr.mxu0 0.0
        %677 = vmatpush1.msra.mxu0 0.0
        %678 = vmatprep.subr.mxu0 0.0
        %679 = vmatpush1.msra.mxu0 0.0
        %680 = vmatprep.subr.mxu0 0.0
        %681 = vmatpush1.msra.mxu0 0.0
        %682 = vmatprep.subr.mxu0 0.0
        %683 = vmatpush1.msra.mxu0 0.0
        %684 = vmatprep.subr.mxu0 0.0
        %685 = vmatpush1.msra.mxu0 0.0
        %686 = vmatprep.subr.mxu0 0.0
        %687 = vmatpush1.msra.mxu0 0.0
        %688 = vmatprep.subr.mxu0 0.0
        %689 = vmatpush1.msra.mxu0 0.0
        %690 = vmatprep.subr.mxu0 0.0
        %691 = vmatpush1.msra.mxu0 0.0
        %692 = vmatprep.subr.mxu0 0.0
        %693 = vmatpush1.msra.mxu0 0.0
        %694 = vmatprep.subr.mxu0 0.0
        %695 = vmatpush1.msra.mxu0 0.0
        %696 = vmatprep.subr.mxu0 0.0
        %697 = vmatpush1.msra.mxu0 0.0
        %698 = vmatprep.subr.mxu0 0.0
        %699 = vmatpush1.msra.mxu0 0.0
        %700 = vmatprep.subr.mxu0 0.0
        %701 = vmatpush1.msra.mxu0 0.0
        %702 = vmatprep.subr.mxu0 0.0
        %703 = vmatpush1.msra.mxu0 0.0
        %704 = vmatprep.subr.mxu0 0.0
        %705 = vmatpush1.msra.mxu0 0.0
        %706 = vmatprep.subr.mxu0 0.0
        %707 = vmatpush1.msra.mxu0 0.0
        %708 = vmatprep.subr.mxu0 0.0
        %709 = vmatpush1.msra.mxu0 0.0
        %710 = vmatprep.subr.mxu0 0.0
        %711 = vmatpush1.msra.mxu0 0.0
        %712 = vmatprep.subr.mxu0 0.0
        %713 = vmatpush1.msra.mxu0 0.0
        %714 = vmatprep.subr.mxu0 0.0
        %715 = vmatpush1.msra.mxu0 0.0
        %716 = vmatprep.subr.mxu0 0.0
        %717 = vmatpush1.msra.mxu0 0.0
        %718 = vmatprep.subr.mxu0 0.0
        %719 = vmatpush1.msra.mxu0 0.0
        %720 = vmatprep.subr.mxu0 0.0
        %721 = vmatpush1.msra.mxu0 0.0
        %722 = vmatprep.subr.mxu0 0.0
        %723 = vmatpush1.msra.mxu0 0.0
        %724 = vmatprep.subr.mxu0 0.0
        %725 = vmatpush1.msra.mxu0 0.0
        %726 = vmatprep.subr.mxu0 0.0
        %727 = vmatpush1.msra.mxu0 0.0
        %728 = vmatprep.subr.mxu0 0.0
        %729 = vmatpush1.msra.mxu0 0.0
        %730 = vmatprep.mubr.f32.mxu0 0.0
        %731 = vmatmul.mubr.f32.gmra.mrb[0].mxu0 %v616
        %v732 = vpop.f32.mrb[0].mxu0
        %v733 = vadd.f32 0.0, %v732
        %v734 = vpop.f32.mrb[0].mxu0
        %735 = vmatprep.mubr.f32.mxu0 0.0
        %736 = vmatmul.mubr.f32.gmra.mrb[0].mxu0 %v619
        %v737 = vpop.f32.mrb[0].mxu0
        %v738 = vadd.f32 0.0, %v737
        %v739 = vpop.f32.mrb[0].mxu0
        %740 = vmatprep.mubr.f32.mxu0 0.0
        %741 = vmatmul.mubr.f32.gmra.mrb[0].mxu0 %v622
        %v742 = vpop.f32.mrb[0].mxu0
        %v743 = vadd.f32 0.0, %v742
        %v744 = vpop.f32.mrb[0].mxu0
        %745 = vmatprep.mubr.f32.mxu0 0.0
        %746 = vmatmul.mubr.f32.gmra.mrb[0].mxu0 %v625
        %v747 = vpop.f32.mrb[0].mxu0
        %v748 = vadd.f32 0.0, %v747
        %v749 = vpop.f32.mrb[0].mxu0
        %750 = vmatprep.mubr.f32.mxu0 0.0
        %751 = vmatmul.mubr.f32.gmra.mrb[0].mxu0 %v628
        %v752 = vpop.f32.mrb[0].mxu0
        %v753 = vadd.f32 0.0, %v752
        %v754 = vpop.f32.mrb[0].mxu0
        %755 = vmatprep.mubr.f32.mxu0 0.0
        %756 = vmatmul.mubr.f32.gmra.mrb[0].mxu0 %v631
        %v757 = vpop.f32.mrb[0].mxu0
        %v758 = vadd.f32 0.0, %v757
        %v759 = vpop.f32.mrb[0].mxu0
        %760 = vmatprep.mubr.f32.mxu0 0.0
        %761 = vmatmul.mubr.f32.gmra.mrb[0].mxu0 %v634
        %v762 = vpop.f32.mrb[0].mxu0
        %v763 = vadd.f32 0.0, %v762
        %v764 = vpop.f32.mrb[0].mxu0
        %765 = vmatprep.mubr.f32.mxu0 0.0
        %766 = vmatmul.mubr.f32.gmra.mrb[0].mxu0 %v637
        %v767 = vpop.f32.mrb[0].mxu0
        %v768 = vadd.f32 0.0, %v767
        %v769 = vpop.f32.mrb[0].mxu0
        %770 = vmatprep.mubr.f32.mxu0 0.0
        %771 = vmatmul.mubr.f32.gmra.mrb[0].mxu0 %v640
        %v772 = vpop.f32.mrb[0].mxu0
        %v773 = vadd.f32 0.0, %v772
        %v774 = vpop.f32.mrb[0].mxu0
        %775 = vmatprep.mubr.f32.mxu0 0.0
        %776 = vmatmul.mubr.f32.gmra.mrb[0].mxu0 %v643
        %v777 = vpop.f32.mrb[0].mxu0
        %v778 = vadd.f32 0.0, %v777
        %v779 = vpop.f32.mrb[0].mxu0
        %780 = vmatprep.mubr.f32.mxu0 0.0
        %781 = vmatmul.mubr.f32.gmra.mrb[0].mxu0 %v646
        %v782 = vpop.f32.mrb[0].mxu0
        %v783 = vadd.f32 0.0, %v782
        %v784 = vpop.f32.mrb[0].mxu0
        %785 = vmatprep.mubr.f32.mxu0 0.0
        %786 = vmatmul.mubr.f32.gmra.mrb[0].mxu0 %v649
        %v787 = vpop.f32.mrb[0].mxu0
        %v788 = vadd.f32 0.0, %v787
        %v789 = vpop.f32.mrb[0].mxu0
        %790 = vmatprep.mubr.f32.mxu0 0.0
        %791 = vmatmul.mubr.f32.gmra.mrb[0].mxu0 %v652
        %v792 = vpop.f32.mrb[0].mxu0
        %v793 = vadd.f32 0.0, %v792
        %v794 = vpop.f32.mrb[0].mxu0
        %795 = vmatprep.mubr.f32.mxu0 0.0
        %796 = vmatmul.mubr.f32.gmra.mrb[0].mxu0 %v655
        %v797 = vpop.f32.mrb[0].mxu0
        %v798 = vadd.f32 0.0, %v797
        %v799 = vpop.f32.mrb[0].mxu0
        %800 = vmatprep.mubr.f32.mxu0 0.0
        %801 = vmatmul.mubr.f32.gmra.mrb[0].mxu0 %v658
        %v802 = vpop.f32.mrb[0].mxu0
        %v803 = vadd.f32 0.0, %v802
        %v804 = vpop.f32.mrb[0].mxu0
        %805 = vmatprep.mubr.f32.mxu0 0.0
        %806 = vmatmul.mubr.f32.gmra.mrb[0].mxu0 %v661
        %v807 = vpop.f32.mrb[0].mxu0
        %v808 = vadd.f32 0.0, %v807
        %v809 = vpop.f32.mrb[0].mxu0
        %810 = vdwg.mxu0
        %v811 = vsel %vm403, %v733, -1e+30
        %v812 = vsel %vm404, %v738, -1e+30
        %v813 = vsel %vm405, %v743, -1e+30
        %v814 = vsel %vm406, %v748, -1e+30
        %v815 = vsel %vm407, %v753, -1e+30
        %v816 = vsel %vm408, %v758, -1e+30
        %v817 = vsel %vm409, %v763, -1e+30
        %v818 = vsel %vm410, %v768, -1e+30
        %v819 = vsel %vm411, %v773, -1e+30
        %v820 = vsel %vm412, %v778, -1e+30
        %v821 = vsel %vm413, %v783, -1e+30
        %v822 = vsel %vm414, %v788, -1e+30
        %v823 = vsel %vm415, %v793, -1e+30
        %v824 = vsel %vm416, %v798, -1e+30
        %v825 = vsel %vm417, %v803, -1e+30
        %v826 = vsel %vm418, %v808, -1e+30
        %827 = vxpose.xlu0.b32.start [1/16] %v811, 128
        %828 = vxpose.xlu0.b32.cont [2/16] %v812, 128
        %829 = vxpose.xlu0.b32.cont [3/16] %v813, 128
        %830 = vxpose.xlu0.b32.cont [4/16] %v814, 128
        %831 = vxpose.xlu0.b32.cont [5/16] %v815, 128
        %832 = vxpose.xlu0.b32.cont [6/16] %v816, 128
        %833 = vxpose.xlu0.b32.cont [7/16] %v817, 128
        %834 = vxpose.xlu0.b32.cont [8/16] %v818, 128
        %835 = vxpose.xlu0.b32.cont [9/16] %v819, 128
        %836 = vxpose.xlu0.b32.cont [10/16] %v820, 128
        %837 = vxpose.xlu0.b32.cont [11/16] %v821, 128
        %838 = vxpose.xlu0.b32.cont [12/16] %v822, 128
        %839 = vxpose.xlu0.b32.cont [13/16] %v823, 128
        %840 = vxpose.xlu0.b32.cont [14/16] %v824, 128
        %841 = vxpose.xlu0.b32.cont [15/16] %v825, 128
        %842 = vxpose.xlu0.b32.end [16/16] %v826, 128
        %v843 = vpop.trf.xlu0
        %v844 = vpop.trf.xlu0
        %v845 = vpop.trf.xlu0
        %v846 = vpop.trf.xlu0
        %v847 = vpop.trf.xlu0
        %v848 = vpop.trf.xlu0
        %v849 = vpop.trf.xlu0
        %v850 = vpop.trf.xlu0
        %v851 = vpop.trf.xlu0
        %v852 = vpop.trf.xlu0
        %v853 = vpop.trf.xlu0
        %v854 = vpop.trf.xlu0
        %v855 = vpop.trf.xlu0
        %v856 = vpop.trf.xlu0
        %v857 = vpop.trf.xlu0
        %v858 = vpop.trf.xlu0
        %859 = vmax.xlane.f32.xlu0 %v811
        %v860 = vpop.xlane.xlu0 %859
        %861 = vmax.xlane.f32.xlu0 %v812
        %v862 = vpop.xlane.xlu0 %861
        %863 = vmax.xlane.f32.xlu0 %v813
        %v864 = vpop.xlane.xlu0 %863
        %865 = vmax.xlane.f32.xlu0 %v814
        %v866 = vpop.xlane.xlu0 %865
        %867 = vmax.xlane.f32.xlu0 %v815
        %v868 = vpop.xlane.xlu0 %867
        %869 = vmax.xlane.f32.xlu0 %v816
        %v870 = vpop.xlane.xlu0 %869
        %871 = vmax.xlane.f32.xlu0 %v817
        %v872 = vpop.xlane.xlu0 %871
        %873 = vmax.xlane.f32.xlu0 %v818
        %v874 = vpop.xlane.xlu0 %873
        %875 = vmax.xlane.f32.xlu0 %v819
        %v876 = vpop.xlane.xlu0 %875
        %877 = vmax.xlane.f32.xlu0 %v820
        %v878 = vpop.xlane.xlu0 %877
        %879 = vmax.xlane.f32.xlu0 %v821
        %v880 = vpop.xlane.xlu0 %879
        %881 = vmax.xlane.f32.xlu0 %v822
        %v882 = vpop.xlane.xlu0 %881
        %883 = vmax.xlane.f32.xlu0 %v823
        %v884 = vpop.xlane.xlu0 %883
        %885 = vmax.xlane.f32.xlu0 %v824
        %v886 = vpop.xlane.xlu0 %885
        %887 = vmax.xlane.f32.xlu0 %v825
        %v888 = vpop.xlane.xlu0 %887
        %889 = vmax.xlane.f32.xlu0 %v826
        %v890 = vpop.xlane.xlu0 %889
        %v891 = vsub.f32 %v811, %v860
        %v892 = vsub.f32 %v812, %v862
        %v893 = vsub.f32 %v813, %v864
        %v894 = vsub.f32 %v814, %v866
        %v895 = vsub.f32 %v815, %v868
        %v896 = vsub.f32 %v816, %v870
        %v897 = vsub.f32 %v817, %v872
        %v898 = vsub.f32 %v818, %v874
        %v899 = vsub.f32 %v819, %v876
        %v900 = vsub.f32 %v820, %v878
        %v901 = vsub.f32 %v821, %v880
        %v902 = vsub.f32 %v822, %v882
        %v903 = vsub.f32 %v823, %v884
        %v904 = vsub.f32 %v824, %v886
        %v905 = vsub.f32 %v825, %v888
        %v906 = vsub.f32 %v826, %v890
        %v907 = vmul.f32 %v891, 1.442695
        %v908 = vpow.pop %v907
        %v909 = vmul.f32 %v892, 1.442695
        %v910 = vpow.pop %v909
        %v911 = vmul.f32 %v893, 1.442695
        %v912 = vpow.pop %v911
        %v913 = vmul.f32 %v894, 1.442695
        %v914 = vpow.pop %v913
        %v915 = vmul.f32 %v895, 1.442695
        %v916 = vpow.pop %v915
        %v917 = vmul.f32 %v896, 1.442695
        %v918 = vpow.pop %v917
        %v919 = vmul.f32 %v897, 1.442695
        %v920 = vpow.pop %v919
        %v921 = vmul.f32 %v898, 1.442695
        %v922 = vpow.pop %v921
        %v923 = vmul.f32 %v899, 1.442695
        %v924 = vpow.pop %v923
        %v925 = vmul.f32 %v900, 1.442695
        %v926 = vpow.pop %v925
        %v927 = vmul.f32 %v901, 1.442695
        %v928 = vpow.pop %v927
        %v929 = vmul.f32 %v902, 1.442695
        %v930 = vpow.pop %v929
        %v931 = vmul.f32 %v903, 1.442695
        %v932 = vpow.pop %v931
        %v933 = vmul.f32 %v904, 1.442695
        %v934 = vpow.pop %v933
        %v935 = vmul.f32 %v905, 1.442695
        %v936 = vpow.pop %v935
        %v937 = vmul.f32 %v906, 1.442695
        %v938 = vpow.pop %v937
        %939 = vadd.xlane.f32.xlu0 %v908
        %v940 = vpop.xlane.xlu0 %939
        %941 = vadd.xlane.f32.xlu0 %v910
        %v942 = vpop.xlane.xlu0 %941
        %943 = vadd.xlane.f32.xlu0 %v912
        %v944 = vpop.xlane.xlu0 %943
        %945 = vadd.xlane.f32.xlu0 %v914
        %v946 = vpop.xlane.xlu0 %945
        %947 = vadd.xlane.f32.xlu0 %v916
        %v948 = vpop.xlane.xlu0 %947
        %949 = vadd.xlane.f32.xlu0 %v918
        %v950 = vpop.xlane.xlu0 %949
        %951 = vadd.xlane.f32.xlu0 %v920
        %v952 = vpop.xlane.xlu0 %951
        %953 = vadd.xlane.f32.xlu0 %v922
        %v954 = vpop.xlane.xlu0 %953
        %955 = vadd.xlane.f32.xlu0 %v924
        %v956 = vpop.xlane.xlu0 %955
        %957 = vadd.xlane.f32.xlu0 %v926
        %v958 = vpop.xlane.xlu0 %957
        %959 = vadd.xlane.f32.xlu0 %v928
        %v960 = vpop.xlane.xlu0 %959
        %961 = vadd.xlane.f32.xlu0 %v930
        %v962 = vpop.xlane.xlu0 %961
        %963 = vadd.xlane.f32.xlu0 %v932
        %v964 = vpop.xlane.xlu0 %963
        %965 = vadd.xlane.f32.xlu0 %v934
        %v966 = vpop.xlane.xlu0 %965
        %967 = vadd.xlane.f32.xlu0 %v936
        %v968 = vpop.xlane.xlu0 %967
        %969 = vadd.xlane.f32.xlu0 %v938
        %v970 = vpop.xlane.xlu0 %969
        %v971 = vrcp.pop %v940
        %v972 = vmul.f32 0.95, %v971
        %v973 = vrcp.pop %v942
        %v974 = vmul.f32 0.95, %v973
        %v975 = vrcp.pop %v944
        %v976 = vmul.f32 0.95, %v975
        %v977 = vrcp.pop %v946
        %v978 = vmul.f32 0.95, %v977
        %v979 = vrcp.pop %v948
        %v980 = vmul.f32 0.95, %v979
        %v981 = vrcp.pop %v950
        %v982 = vmul.f32 0.95, %v981
        %v983 = vrcp.pop %v952
        %v984 = vmul.f32 0.95, %v983
        %v985 = vrcp.pop %v954
        %v986 = vmul.f32 0.95, %v985
        %v987 = vrcp.pop %v956
        %v988 = vmul.f32 0.95, %v987
        %v989 = vrcp.pop %v958
        %v990 = vmul.f32 0.95, %v989
        %v991 = vrcp.pop %v960
        %v992 = vmul.f32 0.95, %v991
        %v993 = vrcp.pop %v962
        %v994 = vmul.f32 0.95, %v993
        %v995 = vrcp.pop %v964
        %v996 = vmul.f32 0.95, %v995
        %v997 = vrcp.pop %v966
        %v998 = vmul.f32 0.95, %v997
        %v999 = vrcp.pop %v968
        %v1000 = vmul.f32 0.95, %v999
        %v1001 = vrcp.pop %v970
        %v1002 = vmul.f32 0.95, %v1001
        %v1003 = vmul.f32 %v908, %v972
        %v1004 = vmul.f32 %v910, %v974
        %v1005 = vmul.f32 %v912, %v976
        %v1006 = vmul.f32 %v914, %v978
        %v1007 = vmul.f32 %v916, %v980
        %v1008 = vmul.f32 %v918, %v982
        %v1009 = vmul.f32 %v920, %v984
        %v1010 = vmul.f32 %v922, %v986
        %v1011 = vmul.f32 %v924, %v988
        %v1012 = vmul.f32 %v926, %v990
        %v1013 = vmul.f32 %v928, %v992
        %v1014 = vmul.f32 %v930, %v994
        %v1015 = vmul.f32 %v932, %v996
        %v1016 = vmul.f32 %v934, %v998
        %v1017 = vmul.f32 %v936, %v1000
        %v1018 = vmul.f32 %v938, %v1002
        %1019 = vmax.xlane.f32.xlu0 %v843
        %v1020 = vpop.xlane.xlu0 %1019
        %1021 = vmax.xlane.f32.xlu0 %v844
        %v1022 = vpop.xlane.xlu0 %1021
        %1023 = vmax.xlane.f32.xlu0 %v845
        %v1024 = vpop.xlane.xlu0 %1023
        %1025 = vmax.xlane.f32.xlu0 %v846
        %v1026 = vpop.xlane.xlu0 %1025
        %1027 = vmax.xlane.f32.xlu0 %v847
        %v1028 = vpop.xlane.xlu0 %1027
        %1029 = vmax.xlane.f32.xlu0 %v848
        %v1030 = vpop.xlane.xlu0 %1029
        %1031 = vmax.xlane.f32.xlu0 %v849
        %v1032 = vpop.xlane.xlu0 %1031
        %1033 = vmax.xlane.f32.xlu0 %v850
        %v1034 = vpop.xlane.xlu0 %1033
        %1035 = vmax.xlane.f32.xlu0 %v851
        %v1036 = vpop.xlane.xlu0 %1035
        %1037 = vmax.xlane.f32.xlu0 %v852
        %v1038 = vpop.xlane.xlu0 %1037
        %1039 = vmax.xlane.f32.xlu0 %v853
        %v1040 = vpop.xlane.xlu0 %1039
        %1041 = vmax.xlane.f32.xlu0 %v854
        %v1042 = vpop.xlane.xlu0 %1041
        %1043 = vmax.xlane.f32.xlu0 %v855
        %v1044 = vpop.xlane.xlu0 %1043
        %1045 = vmax.xlane.f32.xlu0 %v856
        %v1046 = vpop.xlane.xlu0 %1045
        %1047 = vmax.xlane.f32.xlu0 %v857
        %v1048 = vpop.xlane.xlu0 %1047
        %1049 = vmax.xlane.f32.xlu0 %v858
        %v1050 = vpop.xlane.xlu0 %1049
        %v1051 = vsub.f32 %v843, %v1020
        %v1052 = vsub.f32 %v844, %v1022
        %v1053 = vsub.f32 %v845, %v1024
        %v1054 = vsub.f32 %v846, %v1026
        %v1055 = vsub.f32 %v847, %v1028
        %v1056 = vsub.f32 %v848, %v1030
        %v1057 = vsub.f32 %v849, %v1032
        %v1058 = vsub.f32 %v850, %v1034
        %v1059 = vsub.f32 %v851, %v1036
        %v1060 = vsub.f32 %v852, %v1038
        %v1061 = vsub.f32 %v853, %v1040
        %v1062 = vsub.f32 %v854, %v1042
        %v1063 = vsub.f32 %v855, %v1044
        %v1064 = vsub.f32 %v856, %v1046
        %v1065 = vsub.f32 %v857, %v1048
        %v1066 = vsub.f32 %v858, %v1050
        %v1067 = vmul.f32 %v1051, 1.442695
        %v1068 = vpow.pop %v1067
        %v1069 = vmul.f32 %v1052, 1.442695
        %v1070 = vpow.pop %v1069
        %v1071 = vmul.f32 %v1053, 1.442695
        %v1072 = vpow.pop %v1071
        %v1073 = vmul.f32 %v1054, 1.442695
        %v1074 = vpow.pop %v1073
        %v1075 = vmul.f32 %v1055, 1.442695
        %v1076 = vpow.pop %v1075
        %v1077 = vmul.f32 %v1056, 1.442695
        %v1078 = vpow.pop %v1077
        %v1079 = vmul.f32 %v1057, 1.442695
        %v1080 = vpow.pop %v1079
        %v1081 = vmul.f32 %v1058, 1.442695
        %v1082 = vpow.pop %v1081
        %v1083 = vmul.f32 %v1059, 1.442695
        %v1084 = vpow.pop %v1083
        %v1085 = vmul.f32 %v1060, 1.442695
        %v1086 = vpow.pop %v1085
        %v1087 = vmul.f32 %v1061, 1.442695
        %v1088 = vpow.pop %v1087
        %v1089 = vmul.f32 %v1062, 1.442695
        %v1090 = vpow.pop %v1089
        %v1091 = vmul.f32 %v1063, 1.442695
        %v1092 = vpow.pop %v1091
        %v1093 = vmul.f32 %v1064, 1.442695
        %v1094 = vpow.pop %v1093
        %v1095 = vmul.f32 %v1065, 1.442695
        %v1096 = vpow.pop %v1095
        %v1097 = vmul.f32 %v1066, 1.442695
        %v1098 = vpow.pop %v1097
        %1099 = vadd.xlane.f32.xlu0 %v1068
        %v1100 = vpop.xlane.xlu0 %1099
        %1101 = vadd.xlane.f32.xlu0 %v1070
        %v1102 = vpop.xlane.xlu0 %1101
        %1103 = vadd.xlane.f32.xlu0 %v1072
        %v1104 = vpop.xlane.xlu0 %1103
        %1105 = vadd.xlane.f32.xlu0 %v1074
        %v1106 = vpop.xlane.xlu0 %1105
        %1107 = vadd.xlane.f32.xlu0 %v1076
        %v1108 = vpop.xlane.xlu0 %1107
        %1109 = vadd.xlane.f32.xlu0 %v1078
        %v1110 = vpop.xlane.xlu0 %1109
        %1111 = vadd.xlane.f32.xlu0 %v1080
        %v1112 = vpop.xlane.xlu0 %1111
        %1113 = vadd.xlane.f32.xlu0 %v1082
        %v1114 = vpop.xlane.xlu0 %1113
        %1115 = vadd.xlane.f32.xlu0 %v1084
        %v1116 = vpop.xlane.xlu0 %1115
        %1117 = vadd.xlane.f32.xlu0 %v1086
        %v1118 = vpop.xlane.xlu0 %1117
        %1119 = vadd.xlane.f32.xlu0 %v1088
        %v1120 = vpop.xlane.xlu0 %1119
        %1121 = vadd.xlane.f32.xlu0 %v1090
        %v1122 = vpop.xlane.xlu0 %1121
        %1123 = vadd.xlane.f32.xlu0 %v1092
        %v1124 = vpop.xlane.xlu0 %1123
        %1125 = vadd.xlane.f32.xlu0 %v1094
        %v1126 = vpop.xlane.xlu0 %1125
        %1127 = vadd.xlane.f32.xlu0 %v1096
        %v1128 = vpop.xlane.xlu0 %1127
        %1129 = vadd.xlane.f32.xlu0 %v1098
        %v1130 = vpop.xlane.xlu0 %1129
        %v1131 = vrcp.pop %v1100
        %v1132 = vmul.f32 0.95, %v1131
        %v1133 = vrcp.pop %v1102
        %v1134 = vmul.f32 0.95, %v1133
        %v1135 = vrcp.pop %v1104
        %v1136 = vmul.f32 0.95, %v1135
        %v1137 = vrcp.pop %v1106
        %v1138 = vmul.f32 0.95, %v1137
        %v1139 = vrcp.pop %v1108
        %v1140 = vmul.f32 0.95, %v1139
        %v1141 = vrcp.pop %v1110
        %v1142 = vmul.f32 0.95, %v1141
        %v1143 = vrcp.pop %v1112
        %v1144 = vmul.f32 0.95, %v1143
        %v1145 = vrcp.pop %v1114
        %v1146 = vmul.f32 0.95, %v1145
        %v1147 = vrcp.pop %v1116
        %v1148 = vmul.f32 0.95, %v1147
        %v1149 = vrcp.pop %v1118
        %v1150 = vmul.f32 0.95, %v1149
        %v1151 = vrcp.pop %v1120
        %v1152 = vmul.f32 0.95, %v1151
        %v1153 = vrcp.pop %v1122
        %v1154 = vmul.f32 0.95, %v1153
        %v1155 = vrcp.pop %v1124
        %v1156 = vmul.f32 0.95, %v1155
        %v1157 = vrcp.pop %v1126
        %v1158 = vmul.f32 0.95, %v1157
        %v1159 = vrcp.pop %v1128
        %v1160 = vmul.f32 0.95, %v1159
        %v1161 = vrcp.pop %v1130
        %v1162 = vmul.f32 0.95, %v1161
        %v1163 = vmul.f32 %v1068, %v1132
        %v1164 = vmul.f32 %v1070, %v1134
        %v1165 = vmul.f32 %v1072, %v1136
        %v1166 = vmul.f32 %v1074, %v1138
        %v1167 = vmul.f32 %v1076, %v1140
        %v1168 = vmul.f32 %v1078, %v1142
        %v1169 = vmul.f32 %v1080, %v1144
        %v1170 = vmul.f32 %v1082, %v1146
        %v1171 = vmul.f32 %v1084, %v1148
        %v1172 = vmul.f32 %v1086, %v1150
        %v1173 = vmul.f32 %v1088, %v1152
        %v1174 = vmul.f32 %v1090, %v1154
        %v1175 = vmul.f32 %v1092, %v1156
        %v1176 = vmul.f32 %v1094, %v1158
        %v1177 = vmul.f32 %v1096, %v1160
        %v1178 = vmul.f32 %v1098, %v1162
        %v1179 = vmul.f32 %v419, 0.05
        %1180 = vst [vmem:[#allocation2] sm:$0xf] %v419
        %1181 = vst [vmem:[#allocation2 + $0x4] sm:$0xf] %v419
        %1182 = vmatprep.subr.mxu0 0.0
        %1183 = vmatpush1.msra.mxu0 %v1003
        %1184 = vmatprep.subr.mxu0 0.0
        %1185 = vmatpush1.msra.mxu0 %v1004
        %1186 = vmatprep.subr.mxu0 0.0
        %1187 = vmatpush1.msra.mxu0 %v1005
        %1188 = vmatprep.subr.mxu0 0.0
        %1189 = vmatpush1.msra.mxu0 %v1006
        %1190 = vmatprep.subr.mxu0 0.0
        %1191 = vmatpush1.msra.mxu0 %v1007
        %1192 = vmatprep.subr.mxu0 0.0
        %1193 = vmatpush1.msra.mxu0 %v1008
        %1194 = vmatprep.subr.mxu0 0.0
        %1195 = vmatpush1.msra.mxu0 %v1009
        %1196 = vmatprep.subr.mxu0 0.0
        %1197 = vmatpush1.msra.mxu0 %v1010
        %1198 = vmatprep.subr.mxu0 0.0
        %1199 = vmatpush1.msra.mxu0 %v1011
        %1200 = vmatprep.subr.mxu0 0.0
        %1201 = vmatpush1.msra.mxu0 %v1012
        %1202 = vmatprep.subr.mxu0 0.0
        %1203 = vmatpush1.msra.mxu0 %v1013
        %1204 = vmatprep.subr.mxu0 0.0
        %1205 = vmatpush1.msra.mxu0 %v1014
        %1206 = vmatprep.subr.mxu0 0.0
        %1207 = vmatpush1.msra.mxu0 %v1015
        %1208 = vmatprep.subr.mxu0 0.0
        %1209 = vmatpush1.msra.mxu0 %v1016
        %1210 = vmatprep.subr.mxu0 0.0
        %1211 = vmatpush1.msra.mxu0 %v1017
        %1212 = vmatprep.subr.mxu0 0.0
        %1213 = vmatpush1.msra.mxu0 %v1018
        %1214 = vmatprep.subr.mxu0 0.0
        %1215 = vmatpush1.msra.mxu0 0.0
        %1216 = vmatprep.subr.mxu0 0.0
        %1217 = vmatpush1.msra.mxu0 0.0
        %1218 = vmatprep.subr.mxu0 0.0
        %1219 = vmatpush1.msra.mxu0 0.0
        %1220 = vmatprep.subr.mxu0 0.0
        %1221 = vmatpush1.msra.mxu0 0.0
        %1222 = vmatprep.subr.mxu0 0.0
        %1223 = vmatpush1.msra.mxu0 0.0
        %1224 = vmatprep.subr.mxu0 0.0
        %1225 = vmatpush1.msra.mxu0 0.0
        %1226 = vmatprep.subr.mxu0 0.0
        %1227 = vmatpush1.msra.mxu0 0.0
        %1228 = vmatprep.subr.mxu0 0.0
        %1229 = vmatpush1.msra.mxu0 0.0
        %1230 = vmatprep.subr.mxu0 0.0
        %1231 = vmatpush1.msra.mxu0 0.0
        %1232 = vmatprep.subr.mxu0 0.0
        %1233 = vmatpush1.msra.mxu0 0.0
        %1234 = vmatprep.subr.mxu0 0.0
        %1235 = vmatpush1.msra.mxu0 0.0
        %1236 = vmatprep.subr.mxu0 0.0
        %1237 = vmatpush1.msra.mxu0 0.0
        %1238 = vmatprep.subr.mxu0 0.0
        %1239 = vmatpush1.msra.mxu0 0.0
        %1240 = vmatprep.subr.mxu0 0.0
        %1241 = vmatpush1.msra.mxu0 0.0
        %1242 = vmatprep.subr.mxu0 0.0
        %1243 = vmatpush1.msra.mxu0 0.0
        %1244 = vmatprep.subr.mxu0 0.0
        %1245 = vmatpush1.msra.mxu0 0.0
        %1246 = vmatprep.mubr.f32.mxu0 0.0
        %1247 = vmatmul.mubr.f32.gmra.mrb[0].mxu0 %v419
        %v1248 = vpop.f32.mrb[0].mxu0
        %v1249 = vadd.f32 0.0, %v1248
        %v1250 = vpop.f32.mrb[0].mxu0
        %1251 = vdwg.mxu0
        %v1252 = vadd.f32 %v1179, %v1249
        %1253 = vmatprep.subr.mxu0 0.0
        %1254 = vmatpush1.msra.mxu0 %v1163
        %1255 = vmatprep.subr.mxu0 0.0
        %1256 = vmatpush1.msra.mxu0 %v1164
        %1257 = vmatprep.subr.mxu0 0.0
        %1258 = vmatpush1.msra.mxu0 %v1165
        %1259 = vmatprep.subr.mxu0 0.0
        %1260 = vmatpush1.msra.mxu0 %v1166
        %1261 = vmatprep.subr.mxu0 0.0
        %1262 = vmatpush1.msra.mxu0 %v1167
        %1263 = vmatprep.subr.mxu0 0.0
        %1264 = vmatpush1.msra.mxu0 %v1168
        %1265 = vmatprep.subr.mxu0 0.0
        %1266 = vmatpush1.msra.mxu0 %v1169
        %1267 = vmatprep.subr.mxu0 0.0
        %1268 = vmatpush1.msra.mxu0 %v1170
        %1269 = vmatprep.subr.mxu0 0.0
        %1270 = vmatpush1.msra.mxu0 %v1171
        %1271 = vmatprep.subr.mxu0 0.0
        %1272 = vmatpush1.msra.mxu0 %v1172
        %1273 = vmatprep.subr.mxu0 0.0
        %1274 = vmatpush1.msra.mxu0 %v1173
        %1275 = vmatprep.subr.mxu0 0.0
        %1276 = vmatpush1.msra.mxu0 %v1174
        %1277 = vmatprep.subr.mxu0 0.0
        %1278 = vmatpush1.msra.mxu0 %v1175
        %1279 = vmatprep.subr.mxu0 0.0
        %1280 = vmatpush1.msra.mxu0 %v1176
        %1281 = vmatprep.subr.mxu0 0.0
        %1282 = vmatpush1.msra.mxu0 %v1177
        %1283 = vmatprep.subr.mxu0 0.0
        %1284 = vmatpush1.msra.mxu0 %v1178
        %1285 = vmatprep.subr.mxu0 0.0
        %1286 = vmatpush1.msra.mxu0 0.0
        %1287 = vmatprep.subr.mxu0 0.0
        %1288 = vmatpush1.msra.mxu0 0.0
        %1289 = vmatprep.subr.mxu0 0.0
        %1290 = vmatpush1.msra.mxu0 0.0
        %1291 = vmatprep.subr.mxu0 0.0
        %1292 = vmatpush1.msra.mxu0 0.0
        %1293 = vmatprep.subr.mxu0 0.0
        %1294 = vmatpush1.msra.mxu0 0.0
        %1295 = vmatprep.subr.mxu0 0.0
        %1296 = vmatpush1.msra.mxu0 0.0
        %1297 = vmatprep.subr.mxu0 0.0
        %1298 = vmatpush1.msra.mxu0 0.0
        %1299 = vmatprep.subr.mxu0 0.0
        %1300 = vmatpush1.msra.mxu0 0.0
        %1301 = vmatprep.subr.mxu0 0.0
        %1302 = vmatpush1.msra.mxu0 0.0
        %1303 = vmatprep.subr.mxu0 0.0
        %1304 = vmatpush1.msra.mxu0 0.0
        %1305 = vmatprep.subr.mxu0 0.0
        %1306 = vmatpush1.msra.mxu0 0.0
        %1307 = vmatprep.subr.mxu0 0.0
        %1308 = vmatpush1.msra.mxu0 0.0
        %1309 = vmatprep.subr.mxu0 0.0
        %1310 = vmatpush1.msra.mxu0 0.0
        %1311 = vmatprep.subr.mxu0 0.0
        %1312 = vmatpush1.msra.mxu0 0.0
        %1313 = vmatprep.subr.mxu0 0.0
        %1314 = vmatpush1.msra.mxu0 0.0
        %1315 = vmatprep.subr.mxu0 0.0
        %1316 = vmatpush1.msra.mxu0 0.0
        %1317 = vmatprep.mubr.f32.mxu0 0.0
        %1318 = vmatmul.mubr.f32.gmra.mrb[0].mxu0 %v419
        %v1319 = vpop.f32.mrb[0].mxu0
        %v1320 = vadd.f32 0.0, %v1319
        %v1321 = vpop.f32.mrb[0].mxu0
        %1322 = vdwg.mxu0
        %v1323 = vadd.f32 %v1179, %v1320
        %1324 = vst [vmem:[#allocation2 + $0x8] sm:$0xf] %v1252
        %1325 = vst [vmem:[#allocation2 + $0xc] sm:$0xf] %v1323
        %1326 = vmatprep.subr.mxu0 0.0
        %1327 = vmatpush1.msra.mxu0 %v1003
        %1328 = vmatprep.subr.mxu0 0.0
        %1329 = vmatpush1.msra.mxu0 %v1004
        %1330 = vmatprep.subr.mxu0 0.0
        %1331 = vmatpush1.msra.mxu0 %v1005
        %1332 = vmatprep.subr.mxu0 0.0
        %1333 = vmatpush1.msra.mxu0 %v1006
        %1334 = vmatprep.subr.mxu0 0.0
        %1335 = vmatpush1.msra.mxu0 %v1007
        %1336 = vmatprep.subr.mxu0 0.0
        %1337 = vmatpush1.msra.mxu0 %v1008
        %1338 = vmatprep.subr.mxu0 0.0
        %1339 = vmatpush1.msra.mxu0 %v1009
        %1340 = vmatprep.subr.mxu0 0.0
        %1341 = vmatpush1.msra.mxu0 %v1010
        %1342 = vmatprep.subr.mxu0 0.0
        %1343 = vmatpush1.msra.mxu0 %v1011
        %1344 = vmatprep.subr.mxu0 0.0
        %1345 = vmatpush1.msra.mxu0 %v1012
        %1346 = vmatprep.subr.mxu0 0.0
        %1347 = vmatpush1.msra.mxu0 %v1013
        %1348 = vmatprep.subr.mxu0 0.0
        %1349 = vmatpush1.msra.mxu0 %v1014
        %1350 = vmatprep.subr.mxu0 0.0
        %1351 = vmatpush1.msra.mxu0 %v1015
        %1352 = vmatprep.subr.mxu0 0.0
        %1353 = vmatpush1.msra.mxu0 %v1016
        %1354 = vmatprep.subr.mxu0 0.0
        %1355 = vmatpush1.msra.mxu0 %v1017
        %1356 = vmatprep.subr.mxu0 0.0
        %1357 = vmatpush1.msra.mxu0 %v1018
        %1358 = vmatprep.subr.mxu0 0.0
        %1359 = vmatpush1.msra.mxu0 0.0
        %1360 = vmatprep.subr.mxu0 0.0
        %1361 = vmatpush1.msra.mxu0 0.0
        %1362 = vmatprep.subr.mxu0 0.0
        %1363 = vmatpush1.msra.mxu0 0.0
        %1364 = vmatprep.subr.mxu0 0.0
        %1365 = vmatpush1.msra.mxu0 0.0
        %1366 = vmatprep.subr.mxu0 0.0
        %1367 = vmatpush1.msra.mxu0 0.0
        %1368 = vmatprep.subr.mxu0 0.0
        %1369 = vmatpush1.msra.mxu0 0.0
        %1370 = vmatprep.subr.mxu0 0.0
        %1371 = vmatpush1.msra.mxu0 0.0
        %1372 = vmatprep.subr.mxu0 0.0
        %1373 = vmatpush1.msra.mxu0 0.0
        %1374 = vmatprep.subr.mxu0 0.0
        %1375 = vmatpush1.msra.mxu0 0.0
        %1376 = vmatprep.subr.mxu0 0.0
        %1377 = vmatpush1.msra.mxu0 0.0
        %1378 = vmatprep.subr.mxu0 0.0
        %1379 = vmatpush1.msra.mxu0 0.0
        %1380 = vmatprep.subr.mxu0 0.0
        %1381 = vmatpush1.msra.mxu0 0.0
        %1382 = vmatprep.subr.mxu0 0.0
        %1383 = vmatpush1.msra.mxu0 0.0
        %1384 = vmatprep.subr.mxu0 0.0
        %1385 = vmatpush1.msra.mxu0 0.0
        %1386 = vmatprep.subr.mxu0 0.0
        %1387 = vmatpush1.msra.mxu0 0.0
        %1388 = vmatprep.subr.mxu0 0.0
        %1389 = vmatpush1.msra.mxu0 0.0
        %1390 = vmatprep.mubr.f32.mxu0 0.0
        %1391 = vmatmul.mubr.f32.gmra.mrb[0].mxu0 %v1252
        %v1392 = vpop.f32.mrb[0].mxu0
        %v1393 = vadd.f32 0.0, %v1392
        %v1394 = vpop.f32.mrb[0].mxu0
        %1395 = vdwg.mxu0
        %v1396 = vadd.f32 %v1179, %v1393
        %1397 = vmatprep.subr.mxu0 0.0
        %1398 = vmatpush1.msra.mxu0 %v1163
        %1399 = vmatprep.subr.mxu0 0.0
        %1400 = vmatpush1.msra.mxu0 %v1164
        %1401 = vmatprep.subr.mxu0 0.0
        %1402 = vmatpush1.msra.mxu0 %v1165
        %1403 = vmatprep.subr.mxu0 0.0
        %1404 = vmatpush1.msra.mxu0 %v1166
        %1405 = vmatprep.subr.mxu0 0.0
        %1406 = vmatpush1.msra.mxu0 %v1167
        %1407 = vmatprep.subr.mxu0 0.0
        %1408 = vmatpush1.msra.mxu0 %v1168
        %1409 = vmatprep.subr.mxu0 0.0
        %1410 = vmatpush1.msra.mxu0 %v1169
        %1411 = vmatprep.subr.mxu0 0.0
        %1412 = vmatpush1.msra.mxu0 %v1170
        %1413 = vmatprep.subr.mxu0 0.0
        %1414 = vmatpush1.msra.mxu0 %v1171
        %1415 = vmatprep.subr.mxu0 0.0
        %1416 = vmatpush1.msra.mxu0 %v1172
        %1417 = vmatprep.subr.mxu0 0.0
        %1418 = vmatpush1.msra.mxu0 %v1173
        %1419 = vmatprep.subr.mxu0 0.0
        %1420 = vmatpush1.msra.mxu0 %v1174
        %1421 = vmatprep.subr.mxu0 0.0
        %1422 = vmatpush1.msra.mxu0 %v1175
        %1423 = vmatprep.subr.mxu0 0.0
        %1424 = vmatpush1.msra.mxu0 %v1176
        %1425 = vmatprep.subr.mxu0 0.0
        %1426 = vmatpush1.msra.mxu0 %v1177
        %1427 = vmatprep.subr.mxu0 0.0
        %1428 = vmatpush1.msra.mxu0 %v1178
        %1429 = vmatprep.subr.mxu0 0.0
        %1430 = vmatpush1.msra.mxu0 0.0
        %1431 = vmatprep.subr.mxu0 0.0
        %1432 = vmatpush1.msra.mxu0 0.0
        %1433 = vmatprep.subr.mxu0 0.0
        %1434 = vmatpush1.msra.mxu0 0.0
        %1435 = vmatprep.subr.mxu0 0.0
        %1436 = vmatpush1.msra.mxu0 0.0
        %1437 = vmatprep.subr.mxu0 0.0
        %1438 = vmatpush1.msra.mxu0 0.0
        %1439 = vmatprep.subr.mxu0 0.0
        %1440 = vmatpush1.msra.mxu0 0.0
        %1441 = vmatprep.subr.mxu0 0.0
        %1442 = vmatpush1.msra.mxu0 0.0
        %1443 = vmatprep.subr.mxu0 0.0
        %1444 = vmatpush1.msra.mxu0 0.0
        %1445 = vmatprep.subr.mxu0 0.0
        %1446 = vmatpush1.msra.mxu0 0.0
        %1447 = vmatprep.subr.mxu0 0.0
        %1448 = vmatpush1.msra.mxu0 0.0
        %1449 = vmatprep.subr.mxu0 0.0
        %1450 = vmatpush1.msra.mxu0 0.0
        %1451 = vmatprep.subr.mxu0 0.0
        %1452 = vmatpush1.msra.mxu0 0.0
        %1453 = vmatprep.subr.mxu0 0.0
        %1454 = vmatpush1.msra.mxu0 0.0
        %1455 = vmatprep.subr.mxu0 0.0
        %1456 = vmatpush1.msra.mxu0 0.0
        %1457 = vmatprep.subr.mxu0 0.0
        %1458 = vmatpush1.msra.mxu0 0.0
        %1459 = vmatprep.subr.mxu0 0.0
        %1460 = vmatpush1.msra.mxu0 0.0
        %1461 = vmatprep.mubr.f32.mxu0 0.0
        %1462 = vmatmul.mubr.f32.gmra.mrb[0].mxu0 %v1323
        %v1463 = vpop.f32.mrb[0].mxu0
        %v1464 = vadd.f32 0.0, %v1463
        %v1465 = vpop.f32.mrb[0].mxu0
        %1466 = vdwg.mxu0
        %v1467 = vadd.f32 %v1179, %v1464
        %1468 = vst [vmem:[#allocation2 + $0x10] sm:$0xf] %v1396
        %1469 = vst [vmem:[#allocation2 + $0x14] sm:$0xf] %v1467
        %1470 = vmatprep.subr.mxu0 0.0
        %1471 = vmatpush1.msra.mxu0 %v1003
        %1472 = vmatprep.subr.mxu0 0.0
        %1473 = vmatpush1.msra.mxu0 %v1004
        %1474 = vmatprep.subr.mxu0 0.0
        %1475 = vmatpush1.msra.mxu0 %v1005
        %1476 = vmatprep.subr.mxu0 0.0
        %1477 = vmatpush1.msra.mxu0 %v1006
        %1478 = vmatprep.subr.mxu0 0.0
        %1479 = vmatpush1.msra.mxu0 %v1007
        %1480 = vmatprep.subr.mxu0 0.0
        %1481 = vmatpush1.msra.mxu0 %v1008
        %1482 = vmatprep.subr.mxu0 0.0
        %1483 = vmatpush1.msra.mxu0 %v1009
        %1484 = vmatprep.subr.mxu0 0.0
        %1485 = vmatpush1.msra.mxu0 %v1010
        %1486 = vmatprep.subr.mxu0 0.0
        %1487 = vmatpush1.msra.mxu0 %v1011
        %1488 = vmatprep.subr.mxu0 0.0
        %1489 = vmatpush1.msra.mxu0 %v1012
        %1490 = vmatprep.subr.mxu0 0.0
        %1491 = vmatpush1.msra.mxu0 %v1013
        %1492 = vmatprep.subr.mxu0 0.0
        %1493 = vmatpush1.msra.mxu0 %v1014
        %1494 = vmatprep.subr.mxu0 0.0
        %1495 = vmatpush1.msra.mxu0 %v1015
        %1496 = vmatprep.subr.mxu0 0.0
        %1497 = vmatpush1.msra.mxu0 %v1016
        %1498 = vmatprep.subr.mxu0 0.0
        %1499 = vmatpush1.msra.mxu0 %v1017
        %1500 = vmatprep.subr.mxu0 0.0
        %1501 = vmatpush1.msra.mxu0 %v1018
        %1502 = vmatprep.subr.mxu0 0.0
        %1503 = vmatpush1.msra.mxu0 0.0
        %1504 = vmatprep.subr.mxu0 0.0
        %1505 = vmatpush1.msra.mxu0 0.0
        %1506 = vmatprep.subr.mxu0 0.0
        %1507 = vmatpush1.msra.mxu0 0.0
        %1508 = vmatprep.subr.mxu0 0.0
        %1509 = vmatpush1.msra.mxu0 0.0
        %1510 = vmatprep.subr.mxu0 0.0
        %1511 = vmatpush1.msra.mxu0 0.0
        %1512 = vmatprep.subr.mxu0 0.0
        %1513 = vmatpush1.msra.mxu0 0.0
        %1514 = vmatprep.subr.mxu0 0.0
        %1515 = vmatpush1.msra.mxu0 0.0
        %1516 = vmatprep.subr.mxu0 0.0
        %1517 = vmatpush1.msra.mxu0 0.0
        %1518 = vmatprep.subr.mxu0 0.0
        %1519 = vmatpush1.msra.mxu0 0.0
        %1520 = vmatprep.subr.mxu0 0.0
        %1521 = vmatpush1.msra.mxu0 0.0
        %1522 = vmatprep.subr.mxu0 0.0
        %1523 = vmatpush1.msra.mxu0 0.0
        %1524 = vmatprep.subr.mxu0 0.0
        %1525 = vmatpush1.msra.mxu0 0.0
        %1526 = vmatprep.subr.mxu0 0.0
        %1527 = vmatpush1.msra.mxu0 0.0
        %1528 = vmatprep.subr.mxu0 0.0
        %1529 = vmatpush1.msra.mxu0 0.0
        %1530 = vmatprep.subr.mxu0 0.0
        %1531 = vmatpush1.msra.mxu0 0.0
        %1532 = vmatprep.subr.mxu0 0.0
        %1533 = vmatpush1.msra.mxu0 0.0
        %1534 = vmatprep.mubr.f32.mxu0 0.0
        %1535 = vmatmul.mubr.f32.gmra.mrb[0].mxu0 %v1396
        %v1536 = vpop.f32.mrb[0].mxu0
        %v1537 = vadd.f32 0.0, %v1536
        %v1538 = vpop.f32.mrb[0].mxu0
        %1539 = vdwg.mxu0
        %v1540 = vadd.f32 %v1179, %v1537
        %1541 = vmatprep.subr.mxu0 0.0
        %1542 = vmatpush1.msra.mxu0 %v1163
        %1543 = vmatprep.subr.mxu0 0.0
        %1544 = vmatpush1.msra.mxu0 %v1164
        %1545 = vmatprep.subr.mxu0 0.0
        %1546 = vmatpush1.msra.mxu0 %v1165
        %1547 = vmatprep.subr.mxu0 0.0
        %1548 = vmatpush1.msra.mxu0 %v1166
        %1549 = vmatprep.subr.mxu0 0.0
        %1550 = vmatpush1.msra.mxu0 %v1167
        %1551 = vmatprep.subr.mxu0 0.0
        %1552 = vmatpush1.msra.mxu0 %v1168
        %1553 = vmatprep.subr.mxu0 0.0
        %1554 = vmatpush1.msra.mxu0 %v1169
        %1555 = vmatprep.subr.mxu0 0.0
        %1556 = vmatpush1.msra.mxu0 %v1170
        %1557 = vmatprep.subr.mxu0 0.0
        %1558 = vmatpush1.msra.mxu0 %v1171
        %1559 = vmatprep.subr.mxu0 0.0
        %1560 = vmatpush1.msra.mxu0 %v1172
        %1561 = vmatprep.subr.mxu0 0.0
        %1562 = vmatpush1.msra.mxu0 %v1173
        %1563 = vmatprep.subr.mxu0 0.0
        %1564 = vmatpush1.msra.mxu0 %v1174
        %1565 = vmatprep.subr.mxu0 0.0
        %1566 = vmatpush1.msra.mxu0 %v1175
        %1567 = vmatprep.subr.mxu0 0.0
        %1568 = vmatpush1.msra.mxu0 %v1176
        %1569 = vmatprep.subr.mxu0 0.0
        %1570 = vmatpush1.msra.mxu0 %v1177
        %1571 = vmatprep.subr.mxu0 0.0
        %1572 = vmatpush1.msra.mxu0 %v1178
        %1573 = vmatprep.subr.mxu0 0.0
        %1574 = vmatpush1.msra.mxu0 0.0
        %1575 = vmatprep.subr.mxu0 0.0
        %1576 = vmatpush1.msra.mxu0 0.0
        %1577 = vmatprep.subr.mxu0 0.0
        %1578 = vmatpush1.msra.mxu0 0.0
        %1579 = vmatprep.subr.mxu0 0.0
        %1580 = vmatpush1.msra.mxu0 0.0
        %1581 = vmatprep.subr.mxu0 0.0
        %1582 = vmatpush1.msra.mxu0 0.0
        %1583 = vmatprep.subr.mxu0 0.0
        %1584 = vmatpush1.msra.mxu0 0.0
        %1585 = vmatprep.subr.mxu0 0.0
        %1586 = vmatpush1.msra.mxu0 0.0
        %1587 = vmatprep.subr.mxu0 0.0
        %1588 = vmatpush1.msra.mxu0 0.0
        %1589 = vmatprep.subr.mxu0 0.0
        %1590 = vmatpush1.msra.mxu0 0.0
        %1591 = vmatprep.subr.mxu0 0.0
        %1592 = vmatpush1.msra.mxu0 0.0
        %1593 = vmatprep.subr.mxu0 0.0
        %1594 = vmatpush1.msra.mxu0 0.0
        %1595 = vmatprep.subr.mxu0 0.0
        %1596 = vmatpush1.msra.mxu0 0.0
        %1597 = vmatprep.subr.mxu0 0.0
        %1598 = vmatpush1.msra.mxu0 0.0
        %1599 = vmatprep.subr.mxu0 0.0
        %1600 = vmatpush1.msra.mxu0 0.0
        %1601 = vmatprep.subr.mxu0 0.0
        %1602 = vmatpush1.msra.mxu0 0.0
        %1603 = vmatprep.subr.mxu0 0.0
        %1604 = vmatpush1.msra.mxu0 0.0
        %1605 = vmatprep.mubr.f32.mxu0 0.0
        %1606 = vmatmul.mubr.f32.gmra.mrb[0].mxu0 %v1467
        %v1607 = vpop.f32.mrb[0].mxu0
        %v1608 = vadd.f32 0.0, %v1607
        %v1609 = vpop.f32.mrb[0].mxu0
        %1610 = vdwg.mxu0
        %v1611 = vadd.f32 %v1179, %v1608
        %1612 = vst [vmem:[#allocation2 + $0x18] sm:$0xf] %v1540
        %1613 = vst [vmem:[#allocation2 + $0x1c] sm:$0xf] %v1611
        %v1614 = vld [vmem:[#allocation2] sm:$0xff]
        %v1615 = vld [vmem:[#allocation2 + $0x8] sm:$0xff]
        %v1616 = vld [vmem:[#allocation2 + $0x10] sm:$0xff]
        %v1617 = vld [vmem:[#allocation2 + $0x18] sm:$0xff]
        %1619 = vset.pattern.permute.xlu0 0
        %1620 = vperm.xlu0 %1619, %v333
        %v1621 = vpop.permute.xlu0 %1620
        %vm1623 = vcmask 261120
        %v1625 = vsel %vm1623, %v332, 0
        %1627 = vmatprep.subr.mxu0 0.0
        %1628 = vmatpush1.msra.mxu0 %v1614
        %1629 = vmatprep.subr.mxu0 0.0
        %1630 = vmatpush1.msra.mxu0 %v1615
        %1631 = vmatprep.subr.mxu0 0.0
        %1632 = vmatpush1.msra.mxu0 %v1616
        %1633 = vmatprep.subr.mxu0 0.0
        %1634 = vmatpush1.msra.mxu0 %v1617
        %1635 = vmatprep.subr.mxu0 0.0
        %1636 = vmatpush1.msra.mxu0 0.0
        %1637 = vmatprep.subr.mxu0 0.0
        %1638 = vmatpush1.msra.mxu0 0.0
        %1639 = vmatprep.subr.mxu0 0.0
        %1640 = vmatpush1.msra.mxu0 0.0
        %1641 = vmatprep.subr.mxu0 0.0
        %1642 = vmatpush1.msra.mxu0 0.0
        %1643 = vmatprep.subr.mxu0 0.0
        %1644 = vmatpush1.msra.mxu0 0.0
        %1645 = vmatprep.subr.mxu0 0.0
        %1646 = vmatpush1.msra.mxu0 0.0
        %1647 = vmatprep.subr.mxu0 0.0
        %1648 = vmatpush1.msra.mxu0 0.0
        %1649 = vmatprep.subr.mxu0 0.0
        %1650 = vmatpush1.msra.mxu0 0.0
        %1651 = vmatprep.subr.mxu0 0.0
        %1652 = vmatpush1.msra.mxu0 0.0
        %1653 = vmatprep.subr.mxu0 0.0
        %1654 = vmatpush1.msra.mxu0 0.0
        %1655 = vmatprep.subr.mxu0 0.0
        %1656 = vmatpush1.msra.mxu0 0.0
        %1657 = vmatprep.subr.mxu0 0.0
        %1658 = vmatpush1.msra.mxu0 0.0
        %1659 = vmatprep.subr.mxu0 0.0
        %1660 = vmatpush1.msra.mxu0 0.0
        %1661 = vmatprep.subr.mxu0 0.0
        %1662 = vmatpush1.msra.mxu0 0.0
        %1663 = vmatprep.subr.mxu0 0.0
        %1664 = vmatpush1.msra.mxu0 0.0
        %1665 = vmatprep.subr.mxu0 0.0
        %1666 = vmatpush1.msra.mxu0 0.0
        %1667 = vmatprep.subr.mxu0 0.0
        %1668 = vmatpush1.msra.mxu0 0.0
        %1669 = vmatprep.subr.mxu0 0.0
        %1670 = vmatpush1.msra.mxu0 0.0
        %1671 = vmatprep.subr.mxu0 0.0
        %1672 = vmatpush1.msra.mxu0 0.0
        %1673 = vmatprep.subr.mxu0 0.0
        %1674 = vmatpush1.msra.mxu0 0.0
        %1675 = vmatprep.subr.mxu0 0.0
        %1676 = vmatpush1.msra.mxu0 0.0
        %1677 = vmatprep.subr.mxu0 0.0
        %1678 = vmatpush1.msra.mxu0 0.0
        %1679 = vmatprep.subr.mxu0 0.0
        %1680 = vmatpush1.msra.mxu0 0.0
        %1681 = vmatprep.subr.mxu0 0.0
        %1682 = vmatpush1.msra.mxu0 0.0
        %1683 = vmatprep.subr.mxu0 0.0
        %1684 = vmatpush1.msra.mxu0 0.0
        %1685 = vmatprep.subr.mxu0 0.0
        %1686 = vmatpush1.msra.mxu0 0.0
        %1687 = vmatprep.subr.mxu0 0.0
        %1688 = vmatpush1.msra.mxu0 0.0
        %1689 = vmatprep.subr.mxu0 0.0
        %1690 = vmatpush1.msra.mxu0 0.0
        %1691 = vmatprep.mubr.f32.mxu0 0.0
        %1692 = vmatmul.mubr.f32.gmra.mrb[0].mxu0 %v1625
        %v1693 = vpop.f32.mrb[0].mxu0
        %v1694 = vadd.f32 %v1621, %v1693
        %v1695 = vpop.f32.mrb[0].mxu0
        %1696 = vdwg.mxu0
        %1697 = vst [vmem:[%s323] sm:$0xff] %v1694
        %s1698 = sand.u32 %s225, 1
        %s1699 = scalar_lea.sflag [#allocation4], %s1698
        %s1700 = sand.u32 %s225, 1
        %s1701 = smul.addr %s1700, 8
        %s1702 = scalar_lea.vmem [#allocation3], %s1701
        // Predicated region
        $region57: #{tpu_custom_call.1} parent=55 // pred_check
          %p1703 = pneg %p235
        $region58: #{tpu_custom_call.1} parent=55 // pred_check_branch
          %1705 = sbr.rel (%p1703) target = $region60
        $region59: #{tpu_custom_call.1} parent=55 // pred_region
          %s1707 = ssub.s32 128, 128
          %1708 = vsyncadd %s1699, %s1707
          %s1709 = smul.addr %s23, 128
          %s1710 = scalar_lea.hbm %s9, %s1709
          %s1712 = sshll.u32 %s1702, 4
          %s1713 = int_to_ptr.vmem [resolvable:$true] %s1712
          %1715 = dma.vmem_to_hbm [thread:$0]  %s1713, 128, %s1710, %s1699
        $region60: #{tpu_custom_call.1} parent=55 // pred_fallthru
          _
      $region56: #{tpu_custom_call.1} parent=5 // pred_fallthru
        _
      %p1716 = scmp.le.s32.totalorder 2, %s18
      // Predicated region
      $region61: #{tpu_custom_call.1} parent=5 // pred_check
        %p1717 = pneg %p1716
      $region62: #{tpu_custom_call.1} parent=5 // pred_check_branch
        %1719 = sbr.rel (%p1717) target = $region64
      $region63: #{tpu_custom_call.1} parent=5 // pred_region
        %s1720 = ssub.s32 %s18, 2
        // Predicated region
        $region65: #{tpu_custom_call.1} parent=63 // pred_check
          %p1721 = pneg %p241
        $region66: #{tpu_custom_call.1} parent=63 // pred_check_branch
          %1723 = sbr.rel (%p1721) target = $region68
        $region67: #{tpu_custom_call.1} parent=63 // pred_region
          %s1724 = sand.u32 %s226, 1
          %s1725 = scalar_lea.sflag [#allocation4], %s1724
          %s1726 = sand.u32 %s226, 1
          %s1727 = smul.addr %s1726, 8
          %s1728 = scalar_lea.vmem [#allocation3], %s1727
          %1729 = dma.done %s1725, 128
        $region68: #{tpu_custom_call.1} parent=63 // pred_fallthru
          _
      $region64: #{tpu_custom_call.1} parent=5 // pred_fallthru
        _
    $region6: #{tpu_custom_call.1} parent=1 // loop_footer
      %s22 = sadd.s32 1, %s18
    $region7: #{tpu_custom_call.1} parent=1 // loop_footer_branch
      %17 = sbr.rel target = $region3
    $region8: #{tpu_custom_call.1} parent=1 // loop_exit
      _
    %1730 = vsyncpa [#allocation4], 1
    %s1731 = scalar_lea.sflag [#allocation4], 1
    %1732 = vsyncpa %s1731, 1

</llo_original>
